<compile_context>
chip_gen: v7x
topology: tpu7x:2x2x1
jax: 0.10.0
libtpu: 0.0.40
codegen_flags: <defaults>
</compile_context>

<pallas_src>
import numpy as np
import jax
import jax.numpy as jnp
from jax.experimental import pallas as pl
from jax.experimental.pallas import tpu as pltpu

CAR_EMBEDDING_DIM = 3
WORD_EMBEDDING_DIM = 6
HIDDEN_DIM = 6

training_data = [
    ("The dog ate the apple".split(), ["DET", "NN", "V", "DET", "NN"]),
    ("Everybody read that book".split(), ["NN", "V", "DET", "NN"]),
]
tag_to_ix = {"DET": 0, "NN": 1, "V": 2}
TAGSET_SIZE = len(tag_to_ix)

word_to_ix = {}
car_to_ix = {}
for sent, _ in training_data:
    for w in sent:
        if w not in word_to_ix:
            word_to_ix[w] = len(word_to_ix)
        for ch in w:
            if ch not in car_to_ix:
                car_to_ix[ch] = len(car_to_ix)


def prepare_car_sequence(word, to_ix):
    return [to_ix[c] for c in word]


def prepare_sequence(seq, to_ix):
    return [(to_ix[w], prepare_car_sequence(w, car_to_ix)) for w in seq]


# -------------------------------------------------------- parameter slab ----
def _make_layout():
    C, D, H, T = CAR_EMBEDDING_DIM, WORD_EMBEDDING_DIM, HIDDEN_DIM, TAGSET_SIZE
    entries = [
        ("wih_c", C, 4 * C), ("whh_c", C, 4 * C), ("b_c", 1, 4 * C),
        ("wx_w", D, 4 * H), ("wc_w", C, 4 * H), ("whh_w", H, 4 * H),
        ("b_w", 1, 4 * H), ("wt", H, T), ("bt", 1, T),
    ]
    layout, r = {}, 0
    for name, nr, nc in entries:
        layout[name] = (r, nr, nc)
        r += nr
    return layout, r, 4 * H


_LAYOUT, _SLAB_ROWS, _SLAB_COLS = _make_layout()


# ------------------------------------------------------------------ kernel ---
def _vpu_matmul(x, w):
    """x:(R,K) @ w:(K,N) as K unrolled broadcast-FMAs on the VPU (K <= 6)."""
    acc = x[:, 0:1] * w[0:1, :]
    for k in range(1, w.shape[0]):
        acc = acc + x[:, k:k + 1] * w[k:k + 1, :]
    return acc


def _vpu_matmul_rows(x, w_rows):
    """Same, but the K weight rows are pre-sliced/pre-broadcast (hoisted out
    of the serialized recurrence so broadcasts are not re-emitted per step)."""
    acc = x[:, 0:1] * w_rows[0]
    for k in range(1, len(w_rows)):
        acc = acc + x[:, k:k + 1] * w_rows[k]
    return acc


def _vpu_matmul_3d(x, w):
    """x:(L,W,K) contracted with w:(K,N) -> (L,W,N); one fused pass over all
    timesteps (amortizes the weight-row broadcasts over L)."""
    acc = x[..., 0:1] * w[0:1, :][None]
    for k in range(1, w.shape[0]):
        acc = acc + x[..., k:k + 1] * w[k:k + 1, :][None]
    return acc


def _lstm_cell(pre, c, n):
    """PyTorch gate order (i, f, g, o) fused along the last dim.
    One full-width sigmoid (all gates share the vreg's lanes) + one tanh on
    the g slice -> 3 EUP pushes per step instead of 5."""
    sig = jax.nn.sigmoid(pre)                 # (R, 4n)
    i_g = sig[:, 0 * n:1 * n]
    f_g = sig[:, 1 * n:2 * n]
    o_g = sig[:, 3 * n:4 * n]
    g_g = jnp.tanh(pre[:, 2 * n:3 * n])
    c_new = f_g * c + i_g * g_g
    h_new = o_g * jnp.tanh(c_new)
    return h_new, c_new


def lstm_tagger_kernel(
    lens_ref,       # (W, 1)              int32  chars per word
    char_emb_ref,   # (L, W, C)           f32    time-major char embeddings
    word_emb_ref,   # (W, D)              f32    word embeddings
    params_ref,     # (_SLAB_ROWS, _SLAB_COLS) f32  packed parameter slab
    out_ref,        # (W, T)              f32    log-softmax tag scores
):
    L, W, C = char_emb_ref.shape
    H = HIDDEN_DIM

    P = params_ref[...]

    def sl(name):
        r0, nr, nc = _LAYOUT[name]
        return P[r0:r0 + nr, 0:nc]

    wih_c, whh_c, b_c = sl("wih_c"), sl("whh_c"), sl("b_c")
    wx_w, wc_w, whh_w, b_w = sl("wx_w"), sl("wc_w"), sl("whh_w"), sl("b_w")
    wt, bt = sl("wt"), sl("bt")

    xe = char_emb_ref[...]                                 # (L, W, C)
    lens = lens_ref[...]                                   # (W, 1)

    # Freeze masks for every timestep, one vectorized compare (off the
    # serialized recurrence).
    t_iota = jax.lax.broadcasted_iota(jnp.int32, (L, W, 1), 0)
    upd_all = t_iota < lens[None, :, :]                    # (L, W, 1) bool

    # ---- char-level LSTM.  Input contribution x@Wih+b hoisted and fused
    #      across all L timesteps; only h@Whh stays on the serial path.
    x_pre_all = _vpu_matmul_3d(xe, wih_c) + b_c[None]      # (L, W, 4C)

    # Loop-invariant weight-row broadcasts hoisted out of the recurrence.
    whh_c_rows = [jnp.broadcast_to(whh_c[k:k + 1, :], (W, 4 * C))
                  for k in range(C)]

    h_c = jnp.zeros((W, C), jnp.float32)
    c_c = jnp.zeros((W, C), jnp.float32)
    for t in range(L):                                     # fully unrolled
        pre = x_pre_all[t] + _vpu_matmul_rows(h_c, whh_c_rows)   # (W, 4C)
        h_new, c_new = _lstm_cell(pre, c_c, C)
        upd = upd_all[t]                                   # (W, 1) bool
        h_c = jnp.where(upd, h_new, h_c)
        c_c = jnp.where(upd, c_new, c_c)

    # ---- word-level LSTM: hoisted input contribution for all words at once.
    word_pre = (_vpu_matmul(word_emb_ref[...], wx_w)
                + _vpu_matmul(h_c, wc_w)
                + b_w)                                     # (W, 4H)
    whh_w_rows = [whh_w[k:k + 1, :] for k in range(H)]     # (1, 4H) each

    h_w = jnp.zeros((1, H), jnp.float32)
    c_w = jnp.zeros((1, H), jnp.float32)
    h_rows = []
    for w in range(W):                                     # fully unrolled
        pre = word_pre[w:w + 1, :] + _vpu_matmul_rows(h_w, whh_w_rows)
        h_w, c_w = _lstm_cell(pre, c_w, H)
        h_rows.append(h_w)                                 # kept as values
    h_all = jnp.concatenate(h_rows, axis=0)                # (W, H), no VMEM trip

    # ---- hidden2tag + log_softmax, single store of the whole (W, T) block.
    logits = _vpu_matmul(h_all, wt) + bt                   # (W, T)
    m = jnp.max(logits, axis=1, keepdims=True)
    lse = m + jnp.log(jnp.sum(jnp.exp(logits - m), axis=1, keepdims=True))
    out_ref[...] = logits - lse


@jax.jit
def lstm_tagger_forward(char_idx, word_idx, lens,
                        char_emb_table, word_emb_table, params_slab):
    """One jitted executable: embedding gathers (glue) + the Pallas kernel."""
    L, W = char_idx.shape
    char_emb = jnp.take(char_emb_table, char_idx, axis=0)  # (L, W, C)
    word_emb = jnp.take(word_emb_table, word_idx, axis=0)  # (W, D)
    vmem = pl.BlockSpec(memory_space=pltpu.MemorySpace.VMEM)
    # NOTE: batching many sentences onto a "parallel" grid axis (2 TCs on
    # v7x) would add throughput, but the PyTorch forward is single-sentence.
    return pl.pallas_call(
        lstm_tagger_kernel,
        out_shape=jax.ShapeDtypeStruct((W, TAGSET_SIZE), jnp.float32),
        in_specs=[vmem] * 4,
        out_specs=vmem,
    )(lens, char_emb, word_emb, params_slab)


# ------------------------------------------------------------- param setup ---
def init_params(key):
    C, D, H, T = CAR_EMBEDDING_DIM, WORD_EMBEDDING_DIM, HIDDEN_DIM, TAGSET_SIZE
    V, A = len(word_to_ix), len(car_to_ix)
    ks = jax.random.split(key, 12)

    def rn(k, shape, s=0.3):
        return (s * jax.random.normal(k, shape)).astype(jnp.float32)

    return dict(
        char_emb=rn(ks[0], (A, C)),
        word_emb=rn(ks[1], (V, D)),
        w_ih_c=rn(ks[2], (4 * C, C)), w_hh_c=rn(ks[3], (4 * C, C)),
        b_ih_c=rn(ks[4], (4 * C,)), b_hh_c=rn(ks[5], (4 * C,)),
        w_ih_w=rn(ks[6], (4 * H, D + C)), w_hh_w=rn(ks[7], (4 * H, H)),
        b_ih_w=rn(ks[8], (4 * H,)), b_hh_w=rn(ks[9], (4 * H,)),
        wt=rn(ks[10], (T, H)), bt=rn(ks[11], (T,)),
    )


def kernel_params(P):
    """Pack all 9 small parameter tensors into ONE zero-padded f32 slab.
    Gates stay in PyTorch order (i, f, g, o) fused along the last dim."""
    C, D, H, T = CAR_EMBEDDING_DIM, WORD_EMBEDDING_DIM, HIDDEN_DIM, TAGSET_SIZE
    tensors = dict(
        wih_c=P["w_ih_c"].T,                               # (C, 4C)
        whh_c=P["w_hh_c"].T,                               # (C, 4C)
        b_c=(P["b_ih_c"] + P["b_hh_c"]).reshape(1, 4 * C),
        wx_w=P["w_ih_w"][:, :D].T,                         # (D, 4H) word-emb part
        wc_w=P["w_ih_w"][:, D:].T,                         # (C, 4H) char-hidden part
        whh_w=P["w_hh_w"].T,                               # (H, 4H)
        b_w=(P["b_ih_w"] + P["b_hh_w"]).reshape(1, 4 * H),
        wt=P["wt"].T,                                      # (H, T)
        bt=P["bt"].reshape(1, T),
    )
    slab = np.zeros((_SLAB_ROWS, _SLAB_COLS), dtype=np.float32)
    for name, (r0, nr, nc) in _LAYOUT.items():
        slab[r0:r0 + nr, 0:nc] = np.asarray(tensors[name], dtype=np.float32)
    return jnp.asarray(slab)


def build_host_inputs(prepared):
    """Host-side glue only: tiny numpy index arrays (no per-element jnp ops).
    Embedding gathers happen inside the jitted forward."""
    W = len(prepared)
    L = max(len(ci) for _, ci in prepared)
    char_idx = np.zeros((L, W), dtype=np.int32)   # pad idx 0; masked in kernel
    lens = np.zeros((W, 1), dtype=np.int32)
    word_idx = np.zeros((W,), dtype=np.int32)
    for w, (wi, ci) in enumerate(prepared):
        word_idx[w] = wi
        lens[w, 0] = len(ci)
        char_idx[:len(ci), w] = np.asarray(ci, dtype=np.int32)
    return jnp.asarray(char_idx), jnp.asarray(word_idx), jnp.asarray(lens)


# --------------------------------------------------------- plain-JAX oracle ---
def ref_forward(prepared, P):
    C, H = CAR_EMBEDDING_DIM, HIDDEN_DIM
    hp = jax.lax.Precision.HIGHEST

    def cell(x, h, c, w_ih, w_hh, b_ih, b_hh):
        g = (jnp.dot(x, w_ih.T, precision=hp) + jnp.dot(h, w_hh.T, precision=hp)
             + b_ih + b_hh)
        i, f, gg, o = jnp.split(g, 4, axis=-1)
        i, f, o = jax.nn.sigmoid(i), jax.nn.sigmoid(f), jax.nn.sigmoid(o)
        gg = jnp.tanh(gg)
        c = f * c + i * gg
        h = o * jnp.tanh(c)
        return h, c

    char_last = []
    for _, ci in prepared:
        h = jnp.zeros((1, C)); c = jnp.zeros((1, C))
        for idx in ci:
            x = P["char_emb"][idx][None, :]
            h, c = cell(x, h, c, P["w_ih_c"], P["w_hh_c"], P["b_ih_c"], P["b_hh_c"])
        char_last.append(h[0])
    char_h = jnp.stack(char_last)                          # (W, C)
    word_e = P["word_emb"][jnp.array([wi for wi, _ in prepared])]
    x_seq = jnp.concatenate([word_e, char_h], axis=1)      # (W, D+C)
    h = jnp.zeros((1, H)); c = jnp.zeros((1, H))
    outs = []
    for t in range(x_seq.shape[0]):
        h, c = cell(x_seq[t][None, :], h, c,
                    P["w_ih_w"], P["w_hh_w"], P["b_ih_w"], P["b_hh_w"])
        outs.append(h[0])
    lstm_out = jnp.stack(outs)                             # (W, H)
    tag_space = jnp.dot(lstm_out, P["wt"].T, precision=hp) + P["bt"]
    return jax.nn.log_softmax(tag_space, axis=1)


if __name__ == "__main__":
    key = jax.random.PRNGKey(0)
    P = init_params(key)

    test_sentence = training_data[1][0]  # ['Everybody', 'read', 'that', 'book']
    prepared = prepare_sequence(test_sentence, word_to_ix)

    char_idx, word_idx, lens = build_host_inputs(prepared)
    slab = kernel_params(P)

    out = lstm_tagger_forward(char_idx, word_idx, lens,
                              P["char_emb"], P["word_emb"], slab)
    out = jax.block_until_ready(out)

    ref = ref_forward(prepared, P)
    assert out.shape == (len(test_sentence), TAGSET_SIZE)
    # All-f32 VPU path; residual diff is transcendental implementations only.
    np.testing.assert_allclose(np.asarray(out), np.asarray(ref),
                               atol=1e-3, rtol=1e-3)
    print("KERNEL_OK")
</pallas_src>

<mosaic_0001>
module attributes {stable_mosaic.version = 11 : i64} {
  func.func @lstm_tagger_kernel(%arg0: memref<4x1xi32, #tpu.memory_space<vmem>>, %arg1: memref<9x4x3xf32, #tpu.memory_space<vmem>>, %arg2: memref<4x6xf32, #tpu.memory_space<vmem>>, %arg3: memref<30x24xf32, #tpu.memory_space<vmem>>, %arg4: memref<4x3xf32, #tpu.memory_space<vmem>>) attributes {dimension_semantics = [], scalar_prefetch = 0 : i64, scratch_operands = 0 : i64, tpu.core_type = #tpu.core_type<tc>} {
    %c0 = arith.constant 0 : index
    %c0_0 = arith.constant 0 : index
    %0 = vector.load %arg3[%c0, %c0_0] : memref<30x24xf32, #tpu.memory_space<vmem>>, vector<30x24xf32>
    %1 = vector.extract_strided_slice %0 {offsets = [0, 0], sizes = [3, 12], strides = [1, 1]} : vector<30x24xf32> to vector<3x12xf32>
    %2 = vector.extract_strided_slice %0 {offsets = [3, 0], sizes = [3, 12], strides = [1, 1]} : vector<30x24xf32> to vector<3x12xf32>
    %3 = vector.extract_strided_slice %0 {offsets = [6, 0], sizes = [1, 12], strides = [1, 1]} : vector<30x24xf32> to vector<1x12xf32>
    %4 = vector.extract_strided_slice %0 {offsets = [7, 0], sizes = [6, 24], strides = [1, 1]} : vector<30x24xf32> to vector<6x24xf32>
    %5 = vector.extract_strided_slice %0 {offsets = [13, 0], sizes = [3, 24], strides = [1, 1]} : vector<30x24xf32> to vector<3x24xf32>
    %6 = vector.extract_strided_slice %0 {offsets = [16, 0], sizes = [6, 24], strides = [1, 1]} : vector<30x24xf32> to vector<6x24xf32>
    %7 = vector.extract_strided_slice %0 {offsets = [22, 0], sizes = [1, 24], strides = [1, 1]} : vector<30x24xf32> to vector<1x24xf32>
    %8 = vector.extract_strided_slice %0 {offsets = [23, 0], sizes = [6, 3], strides = [1, 1]} : vector<30x24xf32> to vector<6x3xf32>
    %9 = vector.extract_strided_slice %0 {offsets = [29, 0], sizes = [1, 3], strides = [1, 1]} : vector<30x24xf32> to vector<1x3xf32>
    %c0_1 = arith.constant 0 : index
    %c0_2 = arith.constant 0 : index
    %c0_3 = arith.constant 0 : index
    %10 = vector.load %arg1[%c0_1, %c0_2, %c0_3] : memref<9x4x3xf32, #tpu.memory_space<vmem>>, vector<9x4x3xf32>
    %c0_4 = arith.constant 0 : index
    %c0_5 = arith.constant 0 : index
    %11 = vector.load %arg0[%c0_4, %c0_5] : memref<4x1xi32, #tpu.memory_space<vmem>>, vector<4x1xi32>
    %12 = tpu.iota {dimensions = array<i32: 0>} : vector<9x4x1xi32>
    %13 = vector.shape_cast %11 : vector<4x1xi32> to vector<1x4x1xi32>
    %14 = vector.broadcast %13 : vector<1x4x1xi32> to vector<9x4x1xi32>
    %15 = arith.cmpi slt, %12, %14 : vector<9x4x1xi32>
    %16 = vector.extract_strided_slice %10 {offsets = [0, 0, 0], sizes = [9, 4, 1], strides = [1, 1, 1]} : vector<9x4x3xf32> to vector<9x4x1xf32>
    %17 = vector.extract_strided_slice %1 {offsets = [0, 0], sizes = [1, 12], strides = [1, 1]} : vector<3x12xf32> to vector<1x12xf32>
    %18 = vector.shape_cast %17 : vector<1x12xf32> to vector<1x1x12xf32>
    %19 = vector.broadcast %16 : vector<9x4x1xf32> to vector<9x4x12xf32>
    %20 = vector.broadcast %18 : vector<1x1x12xf32> to vector<9x4x12xf32>
    %21 = arith.mulf %19, %20 : vector<9x4x12xf32>
    %22 = vector.extract_strided_slice %10 {offsets = [0, 0, 1], sizes = [9, 4, 1], strides = [1, 1, 1]} : vector<9x4x3xf32> to vector<9x4x1xf32>
    %23 = vector.extract_strided_slice %1 {offsets = [1, 0], sizes = [1, 12], strides = [1, 1]} : vector<3x12xf32> to vector<1x12xf32>
    %24 = vector.shape_cast %23 : vector<1x12xf32> to vector<1x1x12xf32>
    %25 = vector.broadcast %22 : vector<9x4x1xf32> to vector<9x4x12xf32>
    %26 = vector.broadcast %24 : vector<1x1x12xf32> to vector<9x4x12xf32>
    %27 = arith.mulf %25, %26 : vector<9x4x12xf32>
    %28 = arith.addf %21, %27 : vector<9x4x12xf32>
    %29 = vector.extract_strided_slice %10 {offsets = [0, 0, 2], sizes = [9, 4, 1], strides = [1, 1, 1]} : vector<9x4x3xf32> to vector<9x4x1xf32>
    %30 = vector.extract_strided_slice %1 {offsets = [2, 0], sizes = [1, 12], strides = [1, 1]} : vector<3x12xf32> to vector<1x12xf32>
    %31 = vector.shape_cast %30 : vector<1x12xf32> to vector<1x1x12xf32>
    %32 = vector.broadcast %29 : vector<9x4x1xf32> to vector<9x4x12xf32>
    %33 = vector.broadcast %31 : vector<1x1x12xf32> to vector<9x4x12xf32>
    %34 = arith.mulf %32, %33 : vector<9x4x12xf32>
    %35 = arith.addf %28, %34 : vector<9x4x12xf32>
    %36 = vector.shape_cast %3 : vector<1x12xf32> to vector<1x1x12xf32>
    %37 = vector.broadcast %36 : vector<1x1x12xf32> to vector<9x4x12xf32>
    %38 = arith.addf %35, %37 : vector<9x4x12xf32>
    %39 = vector.extract_strided_slice %2 {offsets = [0, 0], sizes = [1, 12], strides = [1, 1]} : vector<3x12xf32> to vector<1x12xf32>
    %40 = vector.shape_cast %39 : vector<1x12xf32> to vector<1x12xf32>
    %41 = vector.broadcast %40 : vector<1x12xf32> to vector<4x12xf32>
    %42 = vector.extract_strided_slice %2 {offsets = [1, 0], sizes = [1, 12], strides = [1, 1]} : vector<3x12xf32> to vector<1x12xf32>
    %43 = vector.shape_cast %42 : vector<1x12xf32> to vector<1x12xf32>
    %44 = vector.broadcast %43 : vector<1x12xf32> to vector<4x12xf32>
    %45 = vector.extract_strided_slice %2 {offsets = [2, 0], sizes = [1, 12], strides = [1, 1]} : vector<3x12xf32> to vector<1x12xf32>
    %46 = vector.shape_cast %45 : vector<1x12xf32> to vector<1x12xf32>
    %47 = vector.broadcast %46 : vector<1x12xf32> to vector<4x12xf32>
    %cst = arith.constant 0.000000e+00 : f32
    %48 = vector.broadcast %cst : f32 to vector<4x3xf32>
    %cst_6 = arith.constant 0.000000e+00 : f32
    %49 = vector.broadcast %cst_6 : f32 to vector<4x3xf32>
    %50 = vector.extract_strided_slice %38 {offsets = [0, 0, 0], sizes = [1, 4, 12], strides = [1, 1, 1]} : vector<9x4x12xf32> to vector<1x4x12xf32>
    %51 = vector.shape_cast %50 : vector<1x4x12xf32> to vector<4x12xf32>
    %52 = vector.extract_strided_slice %48 {offsets = [0, 0], sizes = [4, 1], strides = [1, 1]} : vector<4x3xf32> to vector<4x1xf32>
    %53 = vector.broadcast %52 : vector<4x1xf32> to vector<4x12xf32>
    %54 = arith.mulf %53, %41 : vector<4x12xf32>
    %55 = vector.extract_strided_slice %48 {offsets = [0, 1], sizes = [4, 1], strides = [1, 1]} : vector<4x3xf32> to vector<4x1xf32>
    %56 = vector.broadcast %55 : vector<4x1xf32> to vector<4x12xf32>
    %57 = arith.mulf %56, %44 : vector<4x12xf32>
    %58 = arith.addf %54, %57 : vector<4x12xf32>
    %59 = vector.extract_strided_slice %48 {offsets = [0, 2], sizes = [4, 1], strides = [1, 1]} : vector<4x3xf32> to vector<4x1xf32>
    %60 = vector.broadcast %59 : vector<4x1xf32> to vector<4x12xf32>
    %61 = arith.mulf %60, %47 : vector<4x12xf32>
    %62 = arith.addf %58, %61 : vector<4x12xf32>
    %63 = arith.addf %51, %62 : vector<4x12xf32>
    %64 = arith.negf %63 : vector<4x12xf32>
    %65 = math.exp %64 : vector<4x12xf32>
    %cst_7 = arith.constant 1.000000e+00 : f32
    %66 = vector.broadcast %cst_7 : f32 to vector<4x12xf32>
    %67 = arith.addf %66, %65 : vector<4x12xf32>
    %68 = arith.divf %66, %67 : vector<4x12xf32>
    %69 = vector.extract_strided_slice %68 {offsets = [0, 0], sizes = [4, 3], strides = [1, 1]} : vector<4x12xf32> to vector<4x3xf32>
    %70 = vector.extract_strided_slice %68 {offsets = [0, 3], sizes = [4, 3], strides = [1, 1]} : vector<4x12xf32> to vector<4x3xf32>
    %71 = vector.extract_strided_slice %68 {offsets = [0, 9], sizes = [4, 3], strides = [1, 1]} : vector<4x12xf32> to vector<4x3xf32>
    %72 = vector.extract_strided_slice %63 {offsets = [0, 6], sizes = [4, 3], strides = [1, 1]} : vector<4x12xf32> to vector<4x3xf32>
    %73 = math.tanh %72 : vector<4x3xf32>
    %74 = arith.mulf %70, %49 : vector<4x3xf32>
    %75 = arith.mulf %69, %73 : vector<4x3xf32>
    %76 = arith.addf %74, %75 : vector<4x3xf32>
    %77 = math.tanh %76 : vector<4x3xf32>
    %78 = arith.mulf %71, %77 : vector<4x3xf32>
    %79 = vector.extract_strided_slice %15 {offsets = [0, 0, 0], sizes = [1, 4, 1], strides = [1, 1, 1]} : vector<9x4x1xi1> to vector<1x4x1xi1>
    %80 = vector.shape_cast %79 : vector<1x4x1xi1> to vector<4x1xi1>
    %81 = vector.shape_cast %80 : vector<4x1xi1> to vector<4x1xi1>
    %82 = vector.broadcast %81 : vector<4x1xi1> to vector<4x3xi1>
    %83 = arith.select %82, %78, %48 : vector<4x3xi1>, vector<4x3xf32>
    %84 = vector.shape_cast %80 : vector<4x1xi1> to vector<4x1xi1>
    %85 = vector.broadcast %84 : vector<4x1xi1> to vector<4x3xi1>
    %86 = arith.select %85, %76, %49 : vector<4x3xi1>, vector<4x3xf32>
    %87 = vector.extract_strided_slice %38 {offsets = [1, 0, 0], sizes = [1, 4, 12], strides = [1, 1, 1]} : vector<9x4x12xf32> to vector<1x4x12xf32>
    %88 = vector.shape_cast %87 : vector<1x4x12xf32> to vector<4x12xf32>
    %89 = vector.extract_strided_slice %83 {offsets = [0, 0], sizes = [4, 1], strides = [1, 1]} : vector<4x3xf32> to vector<4x1xf32>
    %90 = vector.broadcast %89 : vector<4x1xf32> to vector<4x12xf32>
    %91 = arith.mulf %90, %41 : vector<4x12xf32>
    %92 = vector.extract_strided_slice %83 {offsets = [0, 1], sizes = [4, 1], strides = [1, 1]} : vector<4x3xf32> to vector<4x1xf32>
    %93 = vector.broadcast %92 : vector<4x1xf32> to vector<4x12xf32>
    %94 = arith.mulf %93, %44 : vector<4x12xf32>
    %95 = arith.addf %91, %94 : vector<4x12xf32>
    %96 = vector.extract_strided_slice %83 {offsets = [0, 2], sizes = [4, 1], strides = [1, 1]} : vector<4x3xf32> to vector<4x1xf32>
    %97 = vector.broadcast %96 : vector<4x1xf32> to vector<4x12xf32>
    %98 = arith.mulf %97, %47 : vector<4x12xf32>
    %99 = arith.addf %95, %98 : vector<4x12xf32>
    %100 = arith.addf %88, %99 : vector<4x12xf32>
    %101 = arith.negf %100 : vector<4x12xf32>
    %102 = math.exp %101 : vector<4x12xf32>
    %cst_8 = arith.constant 1.000000e+00 : f32
    %103 = vector.broadcast %cst_8 : f32 to vector<4x12xf32>
    %104 = arith.addf %103, %102 : vector<4x12xf32>
    %105 = arith.divf %103, %104 : vector<4x12xf32>
    %106 = vector.extract_strided_slice %105 {offsets = [0, 0], sizes = [4, 3], strides = [1, 1]} : vector<4x12xf32> to vector<4x3xf32>
    %107 = vector.extract_strided_slice %105 {offsets = [0, 3], sizes = [4, 3], strides = [1, 1]} : vector<4x12xf32> to vector<4x3xf32>
    %108 = vector.extract_strided_slice %105 {offsets = [0, 9], sizes = [4, 3], strides = [1, 1]} : vector<4x12xf32> to vector<4x3xf32>
    %109 = vector.extract_strided_slice %100 {offsets = [0, 6], sizes = [4, 3], strides = [1, 1]} : vector<4x12xf32> to vector<4x3xf32>
    %110 = math.tanh %109 : vector<4x3xf32>
    %111 = arith.mulf %107, %86 : vector<4x3xf32>
    %112 = arith.mulf %106, %110 : vector<4x3xf32>
    %113 = arith.addf %111, %112 : vector<4x3xf32>
    %114 = math.tanh %113 : vector<4x3xf32>
    %115 = arith.mulf %108, %114 : vector<4x3xf32>
    %116 = vector.extract_strided_slice %15 {offsets = [1, 0, 0], sizes = [1, 4, 1], strides = [1, 1, 1]} : vector<9x4x1xi1> to vector<1x4x1xi1>
    %117 = vector.shape_cast %116 : vector<1x4x1xi1> to vector<4x1xi1>
    %118 = vector.shape_cast %117 : vector<4x1xi1> to vector<4x1xi1>
    %119 = vector.broadcast %118 : vector<4x1xi1> to vector<4x3xi1>
    %120 = arith.select %119, %115, %83 : vector<4x3xi1>, vector<4x3xf32>
    %121 = vector.shape_cast %117 : vector<4x1xi1> to vector<4x1xi1>
    %122 = vector.broadcast %121 : vector<4x1xi1> to vector<4x3xi1>
    %123 = arith.select %122, %113, %86 : vector<4x3xi1>, vector<4x3xf32>
    %124 = vector.extract_strided_slice %38 {offsets = [2, 0, 0], sizes = [1, 4, 12], strides = [1, 1, 1]} : vector<9x4x12xf32> to vector<1x4x12xf32>
    %125 = vector.shape_cast %124 : vector<1x4x12xf32> to vector<4x12xf32>
    %126 = vector.extract_strided_slice %120 {offsets = [0, 0], sizes = [4, 1], strides = [1, 1]} : vector<4x3xf32> to vector<4x1xf32>
    %127 = vector.broadcast %126 : vector<4x1xf32> to vector<4x12xf32>
    %128 = arith.mulf %127, %41 : vector<4x12xf32>
    %129 = vector.extract_strided_slice %120 {offsets = [0, 1], sizes = [4, 1], strides = [1, 1]} : vector<4x3xf32> to vector<4x1xf32>
    %130 = vector.broadcast %129 : vector<4x1xf32> to vector<4x12xf32>
    %131 = arith.mulf %130, %44 : vector<4x12xf32>
    %132 = arith.addf %128, %131 : vector<4x12xf32>
    %133 = vector.extract_strided_slice %120 {offsets = [0, 2], sizes = [4, 1], strides = [1, 1]} : vector<4x3xf32> to vector<4x1xf32>
    %134 = vector.broadcast %133 : vector<4x1xf32> to vector<4x12xf32>
    %135 = arith.mulf %134, %47 : vector<4x12xf32>
    %136 = arith.addf %132, %135 : vector<4x12xf32>
    %137 = arith.addf %125, %136 : vector<4x12xf32>
    %138 = arith.negf %137 : vector<4x12xf32>
    %139 = math.exp %138 : vector<4x12xf32>
    %cst_9 = arith.constant 1.000000e+00 : f32
    %140 = vector.broadcast %cst_9 : f32 to vector<4x12xf32>
    %141 = arith.addf %140, %139 : vector<4x12xf32>
    %142 = arith.divf %140, %141 : vector<4x12xf32>
    %143 = vector.extract_strided_slice %142 {offsets = [0, 0], sizes = [4, 3], strides = [1, 1]} : vector<4x12xf32> to vector<4x3xf32>
    %144 = vector.extract_strided_slice %142 {offsets = [0, 3], sizes = [4, 3], strides = [1, 1]} : vector<4x12xf32> to vector<4x3xf32>
    %145 = vector.extract_strided_slice %142 {offsets = [0, 9], sizes = [4, 3], strides = [1, 1]} : vector<4x12xf32> to vector<4x3xf32>
    %146 = vector.extract_strided_slice %137 {offsets = [0, 6], sizes = [4, 3], strides = [1, 1]} : vector<4x12xf32> to vector<4x3xf32>
    %147 = math.tanh %146 : vector<4x3xf32>
    %148 = arith.mulf %144, %123 : vector<4x3xf32>
    %149 = arith.mulf %143, %147 : vector<4x3xf32>
    %150 = arith.addf %148, %149 : vector<4x3xf32>
    %151 = math.tanh %150 : vector<4x3xf32>
    %152 = arith.mulf %145, %151 : vector<4x3xf32>
    %153 = vector.extract_strided_slice %15 {offsets = [2, 0, 0], sizes = [1, 4, 1], strides = [1, 1, 1]} : vector<9x4x1xi1> to vector<1x4x1xi1>
    %154 = vector.shape_cast %153 : vector<1x4x1xi1> to vector<4x1xi1>
    %155 = vector.shape_cast %154 : vector<4x1xi1> to vector<4x1xi1>
    %156 = vector.broadcast %155 : vector<4x1xi1> to vector<4x3xi1>
    %157 = arith.select %156, %152, %120 : vector<4x3xi1>, vector<4x3xf32>
    %158 = vector.shape_cast %154 : vector<4x1xi1> to vector<4x1xi1>
    %159 = vector.broadcast %158 : vector<4x1xi1> to vector<4x3xi1>
    %160 = arith.select %159, %150, %123 : vector<4x3xi1>, vector<4x3xf32>
    %161 = vector.extract_strided_slice %38 {offsets = [3, 0, 0], sizes = [1, 4, 12], strides = [1, 1, 1]} : vector<9x4x12xf32> to vector<1x4x12xf32>
    %162 = vector.shape_cast %161 : vector<1x4x12xf32> to vector<4x12xf32>
    %163 = vector.extract_strided_slice %157 {offsets = [0, 0], sizes = [4, 1], strides = [1, 1]} : vector<4x3xf32> to vector<4x1xf32>
    %164 = vector.broadcast %163 : vector<4x1xf32> to vector<4x12xf32>
    %165 = arith.mulf %164, %41 : vector<4x12xf32>
    %166 = vector.extract_strided_slice %157 {offsets = [0, 1], sizes = [4, 1], strides = [1, 1]} : vector<4x3xf32> to vector<4x1xf32>
    %167 = vector.broadcast %166 : vector<4x1xf32> to vector<4x12xf32>
    %168 = arith.mulf %167, %44 : vector<4x12xf32>
    %169 = arith.addf %165, %168 : vector<4x12xf32>
    %170 = vector.extract_strided_slice %157 {offsets = [0, 2], sizes = [4, 1], strides = [1, 1]} : vector<4x3xf32> to vector<4x1xf32>
    %171 = vector.broadcast %170 : vector<4x1xf32> to vector<4x12xf32>
    %172 = arith.mulf %171, %47 : vector<4x12xf32>
    %173 = arith.addf %169, %172 : vector<4x12xf32>
    %174 = arith.addf %162, %173 : vector<4x12xf32>
    %175 = arith.negf %174 : vector<4x12xf32>
    %176 = math.exp %175 : vector<4x12xf32>
    %cst_10 = arith.constant 1.000000e+00 : f32
    %177 = vector.broadcast %cst_10 : f32 to vector<4x12xf32>
    %178 = arith.addf %177, %176 : vector<4x12xf32>
    %179 = arith.divf %177, %178 : vector<4x12xf32>
    %180 = vector.extract_strided_slice %179 {offsets = [0, 0], sizes = [4, 3], strides = [1, 1]} : vector<4x12xf32> to vector<4x3xf32>
    %181 = vector.extract_strided_slice %179 {offsets = [0, 3], sizes = [4, 3], strides = [1, 1]} : vector<4x12xf32> to vector<4x3xf32>
    %182 = vector.extract_strided_slice %179 {offsets = [0, 9], sizes = [4, 3], strides = [1, 1]} : vector<4x12xf32> to vector<4x3xf32>
    %183 = vector.extract_strided_slice %174 {offsets = [0, 6], sizes = [4, 3], strides = [1, 1]} : vector<4x12xf32> to vector<4x3xf32>
    %184 = math.tanh %183 : vector<4x3xf32>
    %185 = arith.mulf %181, %160 : vector<4x3xf32>
    %186 = arith.mulf %180, %184 : vector<4x3xf32>
    %187 = arith.addf %185, %186 : vector<4x3xf32>
    %188 = math.tanh %187 : vector<4x3xf32>
    %189 = arith.mulf %182, %188 : vector<4x3xf32>
    %190 = vector.extract_strided_slice %15 {offsets = [3, 0, 0], sizes = [1, 4, 1], strides = [1, 1, 1]} : vector<9x4x1xi1> to vector<1x4x1xi1>
    %191 = vector.shape_cast %190 : vector<1x4x1xi1> to vector<4x1xi1>
    %192 = vector.shape_cast %191 : vector<4x1xi1> to vector<4x1xi1>
    %193 = vector.broadcast %192 : vector<4x1xi1> to vector<4x3xi1>
    %194 = arith.select %193, %189, %157 : vector<4x3xi1>, vector<4x3xf32>
    %195 = vector.shape_cast %191 : vector<4x1xi1> to vector<4x1xi1>
    %196 = vector.broadcast %195 : vector<4x1xi1> to vector<4x3xi1>
    %197 = arith.select %196, %187, %160 : vector<4x3xi1>, vector<4x3xf32>
    %198 = vector.extract_strided_slice %38 {offsets = [4, 0, 0], sizes = [1, 4, 12], strides = [1, 1, 1]} : vector<9x4x12xf32> to vector<1x4x12xf32>
    %199 = vector.shape_cast %198 : vector<1x4x12xf32> to vector<4x12xf32>
    %200 = vector.extract_strided_slice %194 {offsets = [0, 0], sizes = [4, 1], strides = [1, 1]} : vector<4x3xf32> to vector<4x1xf32>
    %201 = vector.broadcast %200 : vector<4x1xf32> to vector<4x12xf32>
    %202 = arith.mulf %201, %41 : vector<4x12xf32>
    %203 = vector.extract_strided_slice %194 {offsets = [0, 1], sizes = [4, 1], strides = [1, 1]} : vector<4x3xf32> to vector<4x1xf32>
    %204 = vector.broadcast %203 : vector<4x1xf32> to vector<4x12xf32>
    %205 = arith.mulf %204, %44 : vector<4x12xf32>
    %206 = arith.addf %202, %205 : vector<4x12xf32>
    %207 = vector.extract_strided_slice %194 {offsets = [0, 2], sizes = [4, 1], strides = [1, 1]} : vector<4x3xf32> to vector<4x1xf32>
    %208 = vector.broadcast %207 : vector<4x1xf32> to vector<4x12xf32>
    %209 = arith.mulf %208, %47 : vector<4x12xf32>
    %210 = arith.addf %206, %209 : vector<4x12xf32>
    %211 = arith.addf %199, %210 : vector<4x12xf32>
    %212 = arith.negf %211 : vector<4x12xf32>
    %213 = math.exp %212 : vector<4x12xf32>
    %cst_11 = arith.constant 1.000000e+00 : f32
    %214 = vector.broadcast %cst_11 : f32 to vector<4x12xf32>
    %215 = arith.addf %214, %213 : vector<4x12xf32>
    %216 = arith.divf %214, %215 : vector<4x12xf32>
    %217 = vector.extract_strided_slice %216 {offsets = [0, 0], sizes = [4, 3], strides = [1, 1]} : vector<4x12xf32> to vector<4x3xf32>
    %218 = vector.extract_strided_slice %216 {offsets = [0, 3], sizes = [4, 3], strides = [1, 1]} : vector<4x12xf32> to vector<4x3xf32>
    %219 = vector.extract_strided_slice %216 {offsets = [0, 9], sizes = [4, 3], strides = [1, 1]} : vector<4x12xf32> to vector<4x3xf32>
    %220 = vector.extract_strided_slice %211 {offsets = [0, 6], sizes = [4, 3], strides = [1, 1]} : vector<4x12xf32> to vector<4x3xf32>
    %221 = math.tanh %220 : vector<4x3xf32>
    %222 = arith.mulf %218, %197 : vector<4x3xf32>
    %223 = arith.mulf %217, %221 : vector<4x3xf32>
    %224 = arith.addf %222, %223 : vector<4x3xf32>
    %225 = math.tanh %224 : vector<4x3xf32>
    %226 = arith.mulf %219, %225 : vector<4x3xf32>
    %227 = vector.extract_strided_slice %15 {offsets = [4, 0, 0], sizes = [1, 4, 1], strides = [1, 1, 1]} : vector<9x4x1xi1> to vector<1x4x1xi1>
    %228 = vector.shape_cast %227 : vector<1x4x1xi1> to vector<4x1xi1>
    %229 = vector.shape_cast %228 : vector<4x1xi1> to vector<4x1xi1>
    %230 = vector.broadcast %229 : vector<4x1xi1> to vector<4x3xi1>
    %231 = arith.select %230, %226, %194 : vector<4x3xi1>, vector<4x3xf32>
    %232 = vector.shape_cast %228 : vector<4x1xi1> to vector<4x1xi1>
    %233 = vector.broadcast %232 : vector<4x1xi1> to vector<4x3xi1>
    %234 = arith.select %233, %224, %197 : vector<4x3xi1>, vector<4x3xf32>
    %235 = vector.extract_strided_slice %38 {offsets = [5, 0, 0], sizes = [1, 4, 12], strides = [1, 1, 1]} : vector<9x4x12xf32> to vector<1x4x12xf32>
    %236 = vector.shape_cast %235 : vector<1x4x12xf32> to vector<4x12xf32>
    %237 = vector.extract_strided_slice %231 {offsets = [0, 0], sizes = [4, 1], strides = [1, 1]} : vector<4x3xf32> to vector<4x1xf32>
    %238 = vector.broadcast %237 : vector<4x1xf32> to vector<4x12xf32>
    %239 = arith.mulf %238, %41 : vector<4x12xf32>
    %240 = vector.extract_strided_slice %231 {offsets = [0, 1], sizes = [4, 1], strides = [1, 1]} : vector<4x3xf32> to vector<4x1xf32>
    %241 = vector.broadcast %240 : vector<4x1xf32> to vector<4x12xf32>
    %242 = arith.mulf %241, %44 : vector<4x12xf32>
    %243 = arith.addf %239, %242 : vector<4x12xf32>
    %244 = vector.extract_strided_slice %231 {offsets = [0, 2], sizes = [4, 1], strides = [1, 1]} : vector<4x3xf32> to vector<4x1xf32>
    %245 = vector.broadcast %244 : vector<4x1xf32> to vector<4x12xf32>
    %246 = arith.mulf %245, %47 : vector<4x12xf32>
    %247 = arith.addf %243, %246 : vector<4x12xf32>
    %248 = arith.addf %236, %247 : vector<4x12xf32>
    %249 = arith.negf %248 : vector<4x12xf32>
    %250 = math.exp %249 : vector<4x12xf32>
    %cst_12 = arith.constant 1.000000e+00 : f32
    %251 = vector.broadcast %cst_12 : f32 to vector<4x12xf32>
    %252 = arith.addf %251, %250 : vector<4x12xf32>
    %253 = arith.divf %251, %252 : vector<4x12xf32>
    %254 = vector.extract_strided_slice %253 {offsets = [0, 0], sizes = [4, 3], strides = [1, 1]} : vector<4x12xf32> to vector<4x3xf32>
    %255 = vector.extract_strided_slice %253 {offsets = [0, 3], sizes = [4, 3], strides = [1, 1]} : vector<4x12xf32> to vector<4x3xf32>
    %256 = vector.extract_strided_slice %253 {offsets = [0, 9], sizes = [4, 3], strides = [1, 1]} : vector<4x12xf32> to vector<4x3xf32>
    %257 = vector.extract_strided_slice %248 {offsets = [0, 6], sizes = [4, 3], strides = [1, 1]} : vector<4x12xf32> to vector<4x3xf32>
    %258 = math.tanh %257 : vector<4x3xf32>
    %259 = arith.mulf %255, %234 : vector<4x3xf32>
    %260 = arith.mulf %254, %258 : vector<4x3xf32>
    %261 = arith.addf %259, %260 : vector<4x3xf32>
    %262 = math.tanh %261 : vector<4x3xf32>
    %263 = arith.mulf %256, %262 : vector<4x3xf32>
    %264 = vector.extract_strided_slice %15 {offsets = [5, 0, 0], sizes = [1, 4, 1], strides = [1, 1, 1]} : vector<9x4x1xi1> to vector<1x4x1xi1>
    %265 = vector.shape_cast %264 : vector<1x4x1xi1> to vector<4x1xi1>
    %266 = vector.shape_cast %265 : vector<4x1xi1> to vector<4x1xi1>
    %267 = vector.broadcast %266 : vector<4x1xi1> to vector<4x3xi1>
    %268 = arith.select %267, %263, %231 : vector<4x3xi1>, vector<4x3xf32>
    %269 = vector.shape_cast %265 : vector<4x1xi1> to vector<4x1xi1>
    %270 = vector.broadcast %269 : vector<4x1xi1> to vector<4x3xi1>
    %271 = arith.select %270, %261, %234 : vector<4x3xi1>, vector<4x3xf32>
    %272 = vector.extract_strided_slice %38 {offsets = [6, 0, 0], sizes = [1, 4, 12], strides = [1, 1, 1]} : vector<9x4x12xf32> to vector<1x4x12xf32>
    %273 = vector.shape_cast %272 : vector<1x4x12xf32> to vector<4x12xf32>
    %274 = vector.extract_strided_slice %268 {offsets = [0, 0], sizes = [4, 1], strides = [1, 1]} : vector<4x3xf32> to vector<4x1xf32>
    %275 = vector.broadcast %274 : vector<4x1xf32> to vector<4x12xf32>
    %276 = arith.mulf %275, %41 : vector<4x12xf32>
    %277 = vector.extract_strided_slice %268 {offsets = [0, 1], sizes = [4, 1], strides = [1, 1]} : vector<4x3xf32> to vector<4x1xf32>
    %278 = vector.broadcast %277 : vector<4x1xf32> to vector<4x12xf32>
    %279 = arith.mulf %278, %44 : vector<4x12xf32>
    %280 = arith.addf %276, %279 : vector<4x12xf32>
    %281 = vector.extract_strided_slice %268 {offsets = [0, 2], sizes = [4, 1], strides = [1, 1]} : vector<4x3xf32> to vector<4x1xf32>
    %282 = vector.broadcast %281 : vector<4x1xf32> to vector<4x12xf32>
    %283 = arith.mulf %282, %47 : vector<4x12xf32>
    %284 = arith.addf %280, %283 : vector<4x12xf32>
    %285 = arith.addf %273, %284 : vector<4x12xf32>
    %286 = arith.negf %285 : vector<4x12xf32>
    %287 = math.exp %286 : vector<4x12xf32>
    %cst_13 = arith.constant 1.000000e+00 : f32
    %288 = vector.broadcast %cst_13 : f32 to vector<4x12xf32>
    %289 = arith.addf %288, %287 : vector<4x12xf32>
    %290 = arith.divf %288, %289 : vector<4x12xf32>
    %291 = vector.extract_strided_slice %290 {offsets = [0, 0], sizes = [4, 3], strides = [1, 1]} : vector<4x12xf32> to vector<4x3xf32>
    %292 = vector.extract_strided_slice %290 {offsets = [0, 3], sizes = [4, 3], strides = [1, 1]} : vector<4x12xf32> to vector<4x3xf32>
    %293 = vector.extract_strided_slice %290 {offsets = [0, 9], sizes = [4, 3], strides = [1, 1]} : vector<4x12xf32> to vector<4x3xf32>
    %294 = vector.extract_strided_slice %285 {offsets = [0, 6], sizes = [4, 3], strides = [1, 1]} : vector<4x12xf32> to vector<4x3xf32>
    %295 = math.tanh %294 : vector<4x3xf32>
    %296 = arith.mulf %292, %271 : vector<4x3xf32>
    %297 = arith.mulf %291, %295 : vector<4x3xf32>
    %298 = arith.addf %296, %297 : vector<4x3xf32>
    %299 = math.tanh %298 : vector<4x3xf32>
    %300 = arith.mulf %293, %299 : vector<4x3xf32>
    %301 = vector.extract_strided_slice %15 {offsets = [6, 0, 0], sizes = [1, 4, 1], strides = [1, 1, 1]} : vector<9x4x1xi1> to vector<1x4x1xi1>
    %302 = vector.shape_cast %301 : vector<1x4x1xi1> to vector<4x1xi1>
    %303 = vector.shape_cast %302 : vector<4x1xi1> to vector<4x1xi1>
    %304 = vector.broadcast %303 : vector<4x1xi1> to vector<4x3xi1>
    %305 = arith.select %304, %300, %268 : vector<4x3xi1>, vector<4x3xf32>
    %306 = vector.shape_cast %302 : vector<4x1xi1> to vector<4x1xi1>
    %307 = vector.broadcast %306 : vector<4x1xi1> to vector<4x3xi1>
    %308 = arith.select %307, %298, %271 : vector<4x3xi1>, vector<4x3xf32>
    %309 = vector.extract_strided_slice %38 {offsets = [7, 0, 0], sizes = [1, 4, 12], strides = [1, 1, 1]} : vector<9x4x12xf32> to vector<1x4x12xf32>
    %310 = vector.shape_cast %309 : vector<1x4x12xf32> to vector<4x12xf32>
    %311 = vector.extract_strided_slice %305 {offsets = [0, 0], sizes = [4, 1], strides = [1, 1]} : vector<4x3xf32> to vector<4x1xf32>
    %312 = vector.broadcast %311 : vector<4x1xf32> to vector<4x12xf32>
    %313 = arith.mulf %312, %41 : vector<4x12xf32>
    %314 = vector.extract_strided_slice %305 {offsets = [0, 1], sizes = [4, 1], strides = [1, 1]} : vector<4x3xf32> to vector<4x1xf32>
    %315 = vector.broadcast %314 : vector<4x1xf32> to vector<4x12xf32>
    %316 = arith.mulf %315, %44 : vector<4x12xf32>
    %317 = arith.addf %313, %316 : vector<4x12xf32>
    %318 = vector.extract_strided_slice %305 {offsets = [0, 2], sizes = [4, 1], strides = [1, 1]} : vector<4x3xf32> to vector<4x1xf32>
    %319 = vector.broadcast %318 : vector<4x1xf32> to vector<4x12xf32>
    %320 = arith.mulf %319, %47 : vector<4x12xf32>
    %321 = arith.addf %317, %320 : vector<4x12xf32>
    %322 = arith.addf %310, %321 : vector<4x12xf32>
    %323 = arith.negf %322 : vector<4x12xf32>
    %324 = math.exp %323 : vector<4x12xf32>
    %cst_14 = arith.constant 1.000000e+00 : f32
    %325 = vector.broadcast %cst_14 : f32 to vector<4x12xf32>
    %326 = arith.addf %325, %324 : vector<4x12xf32>
    %327 = arith.divf %325, %326 : vector<4x12xf32>
    %328 = vector.extract_strided_slice %327 {offsets = [0, 0], sizes = [4, 3], strides = [1, 1]} : vector<4x12xf32> to vector<4x3xf32>
    %329 = vector.extract_strided_slice %327 {offsets = [0, 3], sizes = [4, 3], strides = [1, 1]} : vector<4x12xf32> to vector<4x3xf32>
    %330 = vector.extract_strided_slice %327 {offsets = [0, 9], sizes = [4, 3], strides = [1, 1]} : vector<4x12xf32> to vector<4x3xf32>
    %331 = vector.extract_strided_slice %322 {offsets = [0, 6], sizes = [4, 3], strides = [1, 1]} : vector<4x12xf32> to vector<4x3xf32>
    %332 = math.tanh %331 : vector<4x3xf32>
    %333 = arith.mulf %329, %308 : vector<4x3xf32>
    %334 = arith.mulf %328, %332 : vector<4x3xf32>
    %335 = arith.addf %333, %334 : vector<4x3xf32>
    %336 = math.tanh %335 : vector<4x3xf32>
    %337 = arith.mulf %330, %336 : vector<4x3xf32>
    %338 = vector.extract_strided_slice %15 {offsets = [7, 0, 0], sizes = [1, 4, 1], strides = [1, 1, 1]} : vector<9x4x1xi1> to vector<1x4x1xi1>
    %339 = vector.shape_cast %338 : vector<1x4x1xi1> to vector<4x1xi1>
    %340 = vector.shape_cast %339 : vector<4x1xi1> to vector<4x1xi1>
    %341 = vector.broadcast %340 : vector<4x1xi1> to vector<4x3xi1>
    %342 = arith.select %341, %337, %305 : vector<4x3xi1>, vector<4x3xf32>
    %343 = vector.shape_cast %339 : vector<4x1xi1> to vector<4x1xi1>
    %344 = vector.broadcast %343 : vector<4x1xi1> to vector<4x3xi1>
    %345 = arith.select %344, %335, %308 : vector<4x3xi1>, vector<4x3xf32>
    %346 = vector.extract_strided_slice %38 {offsets = [8, 0, 0], sizes = [1, 4, 12], strides = [1, 1, 1]} : vector<9x4x12xf32> to vector<1x4x12xf32>
    %347 = vector.shape_cast %346 : vector<1x4x12xf32> to vector<4x12xf32>
    %348 = vector.extract_strided_slice %342 {offsets = [0, 0], sizes = [4, 1], strides = [1, 1]} : vector<4x3xf32> to vector<4x1xf32>
    %349 = vector.broadcast %348 : vector<4x1xf32> to vector<4x12xf32>
    %350 = arith.mulf %349, %41 : vector<4x12xf32>
    %351 = vector.extract_strided_slice %342 {offsets = [0, 1], sizes = [4, 1], strides = [1, 1]} : vector<4x3xf32> to vector<4x1xf32>
    %352 = vector.broadcast %351 : vector<4x1xf32> to vector<4x12xf32>
    %353 = arith.mulf %352, %44 : vector<4x12xf32>
    %354 = arith.addf %350, %353 : vector<4x12xf32>
    %355 = vector.extract_strided_slice %342 {offsets = [0, 2], sizes = [4, 1], strides = [1, 1]} : vector<4x3xf32> to vector<4x1xf32>
    %356 = vector.broadcast %355 : vector<4x1xf32> to vector<4x12xf32>
    %357 = arith.mulf %356, %47 : vector<4x12xf32>
    %358 = arith.addf %354, %357 : vector<4x12xf32>
    %359 = arith.addf %347, %358 : vector<4x12xf32>
    %360 = arith.negf %359 : vector<4x12xf32>
    %361 = math.exp %360 : vector<4x12xf32>
    %cst_15 = arith.constant 1.000000e+00 : f32
    %362 = vector.broadcast %cst_15 : f32 to vector<4x12xf32>
    %363 = arith.addf %362, %361 : vector<4x12xf32>
    %364 = arith.divf %362, %363 : vector<4x12xf32>
    %365 = vector.extract_strided_slice %364 {offsets = [0, 0], sizes = [4, 3], strides = [1, 1]} : vector<4x12xf32> to vector<4x3xf32>
    %366 = vector.extract_strided_slice %364 {offsets = [0, 3], sizes = [4, 3], strides = [1, 1]} : vector<4x12xf32> to vector<4x3xf32>
    %367 = vector.extract_strided_slice %364 {offsets = [0, 9], sizes = [4, 3], strides = [1, 1]} : vector<4x12xf32> to vector<4x3xf32>
    %368 = vector.extract_strided_slice %359 {offsets = [0, 6], sizes = [4, 3], strides = [1, 1]} : vector<4x12xf32> to vector<4x3xf32>
    %369 = math.tanh %368 : vector<4x3xf32>
    %370 = arith.mulf %366, %345 : vector<4x3xf32>
    %371 = arith.mulf %365, %369 : vector<4x3xf32>
    %372 = arith.addf %370, %371 : vector<4x3xf32>
    %373 = math.tanh %372 : vector<4x3xf32>
    %374 = arith.mulf %367, %373 : vector<4x3xf32>
    %375 = vector.extract_strided_slice %15 {offsets = [8, 0, 0], sizes = [1, 4, 1], strides = [1, 1, 1]} : vector<9x4x1xi1> to vector<1x4x1xi1>
    %376 = vector.shape_cast %375 : vector<1x4x1xi1> to vector<4x1xi1>
    %377 = vector.shape_cast %376 : vector<4x1xi1> to vector<4x1xi1>
    %378 = vector.broadcast %377 : vector<4x1xi1> to vector<4x3xi1>
    %379 = arith.select %378, %374, %342 : vector<4x3xi1>, vector<4x3xf32>
    %c0_16 = arith.constant 0 : index
    %c0_17 = arith.constant 0 : index
    %380 = vector.load %arg2[%c0_16, %c0_17] : memref<4x6xf32, #tpu.memory_space<vmem>>, vector<4x6xf32>
    %381 = vector.extract_strided_slice %380 {offsets = [0, 0], sizes = [4, 1], strides = [1, 1]} : vector<4x6xf32> to vector<4x1xf32>
    %382 = vector.extract_strided_slice %4 {offsets = [0, 0], sizes = [1, 24], strides = [1, 1]} : vector<6x24xf32> to vector<1x24xf32>
    %383 = vector.broadcast %381 : vector<4x1xf32> to vector<4x24xf32>
    %384 = vector.broadcast %382 : vector<1x24xf32> to vector<4x24xf32>
    %385 = arith.mulf %383, %384 : vector<4x24xf32>
    %386 = vector.extract_strided_slice %380 {offsets = [0, 1], sizes = [4, 1], strides = [1, 1]} : vector<4x6xf32> to vector<4x1xf32>
    %387 = vector.extract_strided_slice %4 {offsets = [1, 0], sizes = [1, 24], strides = [1, 1]} : vector<6x24xf32> to vector<1x24xf32>
    %388 = vector.broadcast %386 : vector<4x1xf32> to vector<4x24xf32>
    %389 = vector.broadcast %387 : vector<1x24xf32> to vector<4x24xf32>
    %390 = arith.mulf %388, %389 : vector<4x24xf32>
    %391 = arith.addf %385, %390 : vector<4x24xf32>
    %392 = vector.extract_strided_slice %380 {offsets = [0, 2], sizes = [4, 1], strides = [1, 1]} : vector<4x6xf32> to vector<4x1xf32>
    %393 = vector.extract_strided_slice %4 {offsets = [2, 0], sizes = [1, 24], strides = [1, 1]} : vector<6x24xf32> to vector<1x24xf32>
    %394 = vector.broadcast %392 : vector<4x1xf32> to vector<4x24xf32>
    %395 = vector.broadcast %393 : vector<1x24xf32> to vector<4x24xf32>
    %396 = arith.mulf %394, %395 : vector<4x24xf32>
    %397 = arith.addf %391, %396 : vector<4x24xf32>
    %398 = vector.extract_strided_slice %380 {offsets = [0, 3], sizes = [4, 1], strides = [1, 1]} : vector<4x6xf32> to vector<4x1xf32>
    %399 = vector.extract_strided_slice %4 {offsets = [3, 0], sizes = [1, 24], strides = [1, 1]} : vector<6x24xf32> to vector<1x24xf32>
    %400 = vector.broadcast %398 : vector<4x1xf32> to vector<4x24xf32>
    %401 = vector.broadcast %399 : vector<1x24xf32> to vector<4x24xf32>
    %402 = arith.mulf %400, %401 : vector<4x24xf32>
    %403 = arith.addf %397, %402 : vector<4x24xf32>
    %404 = vector.extract_strided_slice %380 {offsets = [0, 4], sizes = [4, 1], strides = [1, 1]} : vector<4x6xf32> to vector<4x1xf32>
    %405 = vector.extract_strided_slice %4 {offsets = [4, 0], sizes = [1, 24], strides = [1, 1]} : vector<6x24xf32> to vector<1x24xf32>
    %406 = vector.broadcast %404 : vector<4x1xf32> to vector<4x24xf32>
    %407 = vector.broadcast %405 : vector<1x24xf32> to vector<4x24xf32>
    %408 = arith.mulf %406, %407 : vector<4x24xf32>
    %409 = arith.addf %403, %408 : vector<4x24xf32>
    %410 = vector.extract_strided_slice %380 {offsets = [0, 5], sizes = [4, 1], strides = [1, 1]} : vector<4x6xf32> to vector<4x1xf32>
    %411 = vector.extract_strided_slice %4 {offsets = [5, 0], sizes = [1, 24], strides = [1, 1]} : vector<6x24xf32> to vector<1x24xf32>
    %412 = vector.broadcast %410 : vector<4x1xf32> to vector<4x24xf32>
    %413 = vector.broadcast %411 : vector<1x24xf32> to vector<4x24xf32>
    %414 = arith.mulf %412, %413 : vector<4x24xf32>
    %415 = arith.addf %409, %414 : vector<4x24xf32>
    %416 = vector.extract_strided_slice %379 {offsets = [0, 0], sizes = [4, 1], strides = [1, 1]} : vector<4x3xf32> to vector<4x1xf32>
    %417 = vector.extract_strided_slice %5 {offsets = [0, 0], sizes = [1, 24], strides = [1, 1]} : vector<3x24xf32> to vector<1x24xf32>
    %418 = vector.broadcast %416 : vector<4x1xf32> to vector<4x24xf32>
    %419 = vector.broadcast %417 : vector<1x24xf32> to vector<4x24xf32>
    %420 = arith.mulf %418, %419 : vector<4x24xf32>
    %421 = vector.extract_strided_slice %379 {offsets = [0, 1], sizes = [4, 1], strides = [1, 1]} : vector<4x3xf32> to vector<4x1xf32>
    %422 = vector.extract_strided_slice %5 {offsets = [1, 0], sizes = [1, 24], strides = [1, 1]} : vector<3x24xf32> to vector<1x24xf32>
    %423 = vector.broadcast %421 : vector<4x1xf32> to vector<4x24xf32>
    %424 = vector.broadcast %422 : vector<1x24xf32> to vector<4x24xf32>
    %425 = arith.mulf %423, %424 : vector<4x24xf32>
    %426 = arith.addf %420, %425 : vector<4x24xf32>
    %427 = vector.extract_strided_slice %379 {offsets = [0, 2], sizes = [4, 1], strides = [1, 1]} : vector<4x3xf32> to vector<4x1xf32>
    %428 = vector.extract_strided_slice %5 {offsets = [2, 0], sizes = [1, 24], strides = [1, 1]} : vector<3x24xf32> to vector<1x24xf32>
    %429 = vector.broadcast %427 : vector<4x1xf32> to vector<4x24xf32>
    %430 = vector.broadcast %428 : vector<1x24xf32> to vector<4x24xf32>
    %431 = arith.mulf %429, %430 : vector<4x24xf32>
    %432 = arith.addf %426, %431 : vector<4x24xf32>
    %433 = arith.addf %415, %432 : vector<4x24xf32>
    %434 = vector.broadcast %7 : vector<1x24xf32> to vector<4x24xf32>
    %435 = arith.addf %433, %434 : vector<4x24xf32>
    %436 = vector.extract_strided_slice %6 {offsets = [0, 0], sizes = [1, 24], strides = [1, 1]} : vector<6x24xf32> to vector<1x24xf32>
    %437 = vector.extract_strided_slice %6 {offsets = [1, 0], sizes = [1, 24], strides = [1, 1]} : vector<6x24xf32> to vector<1x24xf32>
    %438 = vector.extract_strided_slice %6 {offsets = [2, 0], sizes = [1, 24], strides = [1, 1]} : vector<6x24xf32> to vector<1x24xf32>
    %439 = vector.extract_strided_slice %6 {offsets = [3, 0], sizes = [1, 24], strides = [1, 1]} : vector<6x24xf32> to vector<1x24xf32>
    %440 = vector.extract_strided_slice %6 {offsets = [4, 0], sizes = [1, 24], strides = [1, 1]} : vector<6x24xf32> to vector<1x24xf32>
    %441 = vector.extract_strided_slice %6 {offsets = [5, 0], sizes = [1, 24], strides = [1, 1]} : vector<6x24xf32> to vector<1x24xf32>
    %cst_18 = arith.constant 0.000000e+00 : f32
    %442 = vector.broadcast %cst_18 : f32 to vector<1x6xf32>
    %cst_19 = arith.constant 0.000000e+00 : f32
    %443 = vector.broadcast %cst_19 : f32 to vector<1x6xf32>
    %444 = vector.extract_strided_slice %435 {offsets = [0, 0], sizes = [1, 24], strides = [1, 1]} : vector<4x24xf32> to vector<1x24xf32>
    %445 = vector.extract_strided_slice %442 {offsets = [0, 0], sizes = [1, 1], strides = [1, 1]} : vector<1x6xf32> to vector<1x1xf32>
    %446 = vector.broadcast %445 : vector<1x1xf32> to vector<1x24xf32>
    %447 = arith.mulf %446, %436 : vector<1x24xf32>
    %448 = vector.extract_strided_slice %442 {offsets = [0, 1], sizes = [1, 1], strides = [1, 1]} : vector<1x6xf32> to vector<1x1xf32>
    %449 = vector.broadcast %448 : vector<1x1xf32> to vector<1x24xf32>
    %450 = arith.mulf %449, %437 : vector<1x24xf32>
    %451 = arith.addf %447, %450 : vector<1x24xf32>
    %452 = vector.extract_strided_slice %442 {offsets = [0, 2], sizes = [1, 1], strides = [1, 1]} : vector<1x6xf32> to vector<1x1xf32>
    %453 = vector.broadcast %452 : vector<1x1xf32> to vector<1x24xf32>
    %454 = arith.mulf %453, %438 : vector<1x24xf32>
    %455 = arith.addf %451, %454 : vector<1x24xf32>
    %456 = vector.extract_strided_slice %442 {offsets = [0, 3], sizes = [1, 1], strides = [1, 1]} : vector<1x6xf32> to vector<1x1xf32>
    %457 = vector.broadcast %456 : vector<1x1xf32> to vector<1x24xf32>
    %458 = arith.mulf %457, %439 : vector<1x24xf32>
    %459 = arith.addf %455, %458 : vector<1x24xf32>
    %460 = vector.extract_strided_slice %442 {offsets = [0, 4], sizes = [1, 1], strides = [1, 1]} : vector<1x6xf32> to vector<1x1xf32>
    %461 = vector.broadcast %460 : vector<1x1xf32> to vector<1x24xf32>
    %462 = arith.mulf %461, %440 : vector<1x24xf32>
    %463 = arith.addf %459, %462 : vector<1x24xf32>
    %464 = vector.extract_strided_slice %442 {offsets = [0, 5], sizes = [1, 1], strides = [1, 1]} : vector<1x6xf32> to vector<1x1xf32>
    %465 = vector.broadcast %464 : vector<1x1xf32> to vector<1x24xf32>
    %466 = arith.mulf %465, %441 : vector<1x24xf32>
    %467 = arith.addf %463, %466 : vector<1x24xf32>
    %468 = arith.addf %444, %467 : vector<1x24xf32>
    %469 = arith.negf %468 : vector<1x24xf32>
    %470 = math.exp %469 : vector<1x24xf32>
    %cst_20 = arith.constant 1.000000e+00 : f32
    %471 = vector.broadcast %cst_20 : f32 to vector<1x24xf32>
    %472 = arith.addf %471, %470 : vector<1x24xf32>
    %473 = arith.divf %471, %472 : vector<1x24xf32>
    %474 = vector.extract_strided_slice %473 {offsets = [0, 0], sizes = [1, 6], strides = [1, 1]} : vector<1x24xf32> to vector<1x6xf32>
    %475 = vector.extract_strided_slice %473 {offsets = [0, 6], sizes = [1, 6], strides = [1, 1]} : vector<1x24xf32> to vector<1x6xf32>
    %476 = vector.extract_strided_slice %473 {offsets = [0, 18], sizes = [1, 6], strides = [1, 1]} : vector<1x24xf32> to vector<1x6xf32>
    %477 = vector.extract_strided_slice %468 {offsets = [0, 12], sizes = [1, 6], strides = [1, 1]} : vector<1x24xf32> to vector<1x6xf32>
    %478 = math.tanh %477 : vector<1x6xf32>
    %479 = arith.mulf %475, %443 : vector<1x6xf32>
    %480 = arith.mulf %474, %478 : vector<1x6xf32>
    %481 = arith.addf %479, %480 : vector<1x6xf32>
    %482 = math.tanh %481 : vector<1x6xf32>
    %483 = arith.mulf %476, %482 : vector<1x6xf32>
    %484 = vector.extract_strided_slice %435 {offsets = [1, 0], sizes = [1, 24], strides = [1, 1]} : vector<4x24xf32> to vector<1x24xf32>
    %485 = vector.extract_strided_slice %483 {offsets = [0, 0], sizes = [1, 1], strides = [1, 1]} : vector<1x6xf32> to vector<1x1xf32>
    %486 = vector.broadcast %485 : vector<1x1xf32> to vector<1x24xf32>
    %487 = arith.mulf %486, %436 : vector<1x24xf32>
    %488 = vector.extract_strided_slice %483 {offsets = [0, 1], sizes = [1, 1], strides = [1, 1]} : vector<1x6xf32> to vector<1x1xf32>
    %489 = vector.broadcast %488 : vector<1x1xf32> to vector<1x24xf32>
    %490 = arith.mulf %489, %437 : vector<1x24xf32>
    %491 = arith.addf %487, %490 : vector<1x24xf32>
    %492 = vector.extract_strided_slice %483 {offsets = [0, 2], sizes = [1, 1], strides = [1, 1]} : vector<1x6xf32> to vector<1x1xf32>
    %493 = vector.broadcast %492 : vector<1x1xf32> to vector<1x24xf32>
    %494 = arith.mulf %493, %438 : vector<1x24xf32>
    %495 = arith.addf %491, %494 : vector<1x24xf32>
    %496 = vector.extract_strided_slice %483 {offsets = [0, 3], sizes = [1, 1], strides = [1, 1]} : vector<1x6xf32> to vector<1x1xf32>
    %497 = vector.broadcast %496 : vector<1x1xf32> to vector<1x24xf32>
    %498 = arith.mulf %497, %439 : vector<1x24xf32>
    %499 = arith.addf %495, %498 : vector<1x24xf32>
    %500 = vector.extract_strided_slice %483 {offsets = [0, 4], sizes = [1, 1], strides = [1, 1]} : vector<1x6xf32> to vector<1x1xf32>
    %501 = vector.broadcast %500 : vector<1x1xf32> to vector<1x24xf32>
    %502 = arith.mulf %501, %440 : vector<1x24xf32>
    %503 = arith.addf %499, %502 : vector<1x24xf32>
    %504 = vector.extract_strided_slice %483 {offsets = [0, 5], sizes = [1, 1], strides = [1, 1]} : vector<1x6xf32> to vector<1x1xf32>
    %505 = vector.broadcast %504 : vector<1x1xf32> to vector<1x24xf32>
    %506 = arith.mulf %505, %441 : vector<1x24xf32>
    %507 = arith.addf %503, %506 : vector<1x24xf32>
    %508 = arith.addf %484, %507 : vector<1x24xf32>
    %509 = arith.negf %508 : vector<1x24xf32>
    %510 = math.exp %509 : vector<1x24xf32>
    %cst_21 = arith.constant 1.000000e+00 : f32
    %511 = vector.broadcast %cst_21 : f32 to vector<1x24xf32>
    %512 = arith.addf %511, %510 : vector<1x24xf32>
    %513 = arith.divf %511, %512 : vector<1x24xf32>
    %514 = vector.extract_strided_slice %513 {offsets = [0, 0], sizes = [1, 6], strides = [1, 1]} : vector<1x24xf32> to vector<1x6xf32>
    %515 = vector.extract_strided_slice %513 {offsets = [0, 6], sizes = [1, 6], strides = [1, 1]} : vector<1x24xf32> to vector<1x6xf32>
    %516 = vector.extract_strided_slice %513 {offsets = [0, 18], sizes = [1, 6], strides = [1, 1]} : vector<1x24xf32> to vector<1x6xf32>
    %517 = vector.extract_strided_slice %508 {offsets = [0, 12], sizes = [1, 6], strides = [1, 1]} : vector<1x24xf32> to vector<1x6xf32>
    %518 = math.tanh %517 : vector<1x6xf32>
    %519 = arith.mulf %515, %481 : vector<1x6xf32>
    %520 = arith.mulf %514, %518 : vector<1x6xf32>
    %521 = arith.addf %519, %520 : vector<1x6xf32>
    %522 = math.tanh %521 : vector<1x6xf32>
    %523 = arith.mulf %516, %522 : vector<1x6xf32>
    %524 = vector.extract_strided_slice %435 {offsets = [2, 0], sizes = [1, 24], strides = [1, 1]} : vector<4x24xf32> to vector<1x24xf32>
    %525 = vector.extract_strided_slice %523 {offsets = [0, 0], sizes = [1, 1], strides = [1, 1]} : vector<1x6xf32> to vector<1x1xf32>
    %526 = vector.broadcast %525 : vector<1x1xf32> to vector<1x24xf32>
    %527 = arith.mulf %526, %436 : vector<1x24xf32>
    %528 = vector.extract_strided_slice %523 {offsets = [0, 1], sizes = [1, 1], strides = [1, 1]} : vector<1x6xf32> to vector<1x1xf32>
    %529 = vector.broadcast %528 : vector<1x1xf32> to vector<1x24xf32>
    %530 = arith.mulf %529, %437 : vector<1x24xf32>
    %531 = arith.addf %527, %530 : vector<1x24xf32>
    %532 = vector.extract_strided_slice %523 {offsets = [0, 2], sizes = [1, 1], strides = [1, 1]} : vector<1x6xf32> to vector<1x1xf32>
    %533 = vector.broadcast %532 : vector<1x1xf32> to vector<1x24xf32>
    %534 = arith.mulf %533, %438 : vector<1x24xf32>
    %535 = arith.addf %531, %534 : vector<1x24xf32>
    %536 = vector.extract_strided_slice %523 {offsets = [0, 3], sizes = [1, 1], strides = [1, 1]} : vector<1x6xf32> to vector<1x1xf32>
    %537 = vector.broadcast %536 : vector<1x1xf32> to vector<1x24xf32>
    %538 = arith.mulf %537, %439 : vector<1x24xf32>
    %539 = arith.addf %535, %538 : vector<1x24xf32>
    %540 = vector.extract_strided_slice %523 {offsets = [0, 4], sizes = [1, 1], strides = [1, 1]} : vector<1x6xf32> to vector<1x1xf32>
    %541 = vector.broadcast %540 : vector<1x1xf32> to vector<1x24xf32>
    %542 = arith.mulf %541, %440 : vector<1x24xf32>
    %543 = arith.addf %539, %542 : vector<1x24xf32>
    %544 = vector.extract_strided_slice %523 {offsets = [0, 5], sizes = [1, 1], strides = [1, 1]} : vector<1x6xf32> to vector<1x1xf32>
    %545 = vector.broadcast %544 : vector<1x1xf32> to vector<1x24xf32>
    %546 = arith.mulf %545, %441 : vector<1x24xf32>
    %547 = arith.addf %543, %546 : vector<1x24xf32>
    %548 = arith.addf %524, %547 : vector<1x24xf32>
    %549 = arith.negf %548 : vector<1x24xf32>
    %550 = math.exp %549 : vector<1x24xf32>
    %cst_22 = arith.constant 1.000000e+00 : f32
    %551 = vector.broadcast %cst_22 : f32 to vector<1x24xf32>
    %552 = arith.addf %551, %550 : vector<1x24xf32>
    %553 = arith.divf %551, %552 : vector<1x24xf32>
    %554 = vector.extract_strided_slice %553 {offsets = [0, 0], sizes = [1, 6], strides = [1, 1]} : vector<1x24xf32> to vector<1x6xf32>
    %555 = vector.extract_strided_slice %553 {offsets = [0, 6], sizes = [1, 6], strides = [1, 1]} : vector<1x24xf32> to vector<1x6xf32>
    %556 = vector.extract_strided_slice %553 {offsets = [0, 18], sizes = [1, 6], strides = [1, 1]} : vector<1x24xf32> to vector<1x6xf32>
    %557 = vector.extract_strided_slice %548 {offsets = [0, 12], sizes = [1, 6], strides = [1, 1]} : vector<1x24xf32> to vector<1x6xf32>
    %558 = math.tanh %557 : vector<1x6xf32>
    %559 = arith.mulf %555, %521 : vector<1x6xf32>
    %560 = arith.mulf %554, %558 : vector<1x6xf32>
    %561 = arith.addf %559, %560 : vector<1x6xf32>
    %562 = math.tanh %561 : vector<1x6xf32>
    %563 = arith.mulf %556, %562 : vector<1x6xf32>
    %564 = vector.extract_strided_slice %435 {offsets = [3, 0], sizes = [1, 24], strides = [1, 1]} : vector<4x24xf32> to vector<1x24xf32>
    %565 = vector.extract_strided_slice %563 {offsets = [0, 0], sizes = [1, 1], strides = [1, 1]} : vector<1x6xf32> to vector<1x1xf32>
    %566 = vector.broadcast %565 : vector<1x1xf32> to vector<1x24xf32>
    %567 = arith.mulf %566, %436 : vector<1x24xf32>
    %568 = vector.extract_strided_slice %563 {offsets = [0, 1], sizes = [1, 1], strides = [1, 1]} : vector<1x6xf32> to vector<1x1xf32>
    %569 = vector.broadcast %568 : vector<1x1xf32> to vector<1x24xf32>
    %570 = arith.mulf %569, %437 : vector<1x24xf32>
    %571 = arith.addf %567, %570 : vector<1x24xf32>
    %572 = vector.extract_strided_slice %563 {offsets = [0, 2], sizes = [1, 1], strides = [1, 1]} : vector<1x6xf32> to vector<1x1xf32>
    %573 = vector.broadcast %572 : vector<1x1xf32> to vector<1x24xf32>
    %574 = arith.mulf %573, %438 : vector<1x24xf32>
    %575 = arith.addf %571, %574 : vector<1x24xf32>
    %576 = vector.extract_strided_slice %563 {offsets = [0, 3], sizes = [1, 1], strides = [1, 1]} : vector<1x6xf32> to vector<1x1xf32>
    %577 = vector.broadcast %576 : vector<1x1xf32> to vector<1x24xf32>
    %578 = arith.mulf %577, %439 : vector<1x24xf32>
    %579 = arith.addf %575, %578 : vector<1x24xf32>
    %580 = vector.extract_strided_slice %563 {offsets = [0, 4], sizes = [1, 1], strides = [1, 1]} : vector<1x6xf32> to vector<1x1xf32>
    %581 = vector.broadcast %580 : vector<1x1xf32> to vector<1x24xf32>
    %582 = arith.mulf %581, %440 : vector<1x24xf32>
    %583 = arith.addf %579, %582 : vector<1x24xf32>
    %584 = vector.extract_strided_slice %563 {offsets = [0, 5], sizes = [1, 1], strides = [1, 1]} : vector<1x6xf32> to vector<1x1xf32>
    %585 = vector.broadcast %584 : vector<1x1xf32> to vector<1x24xf32>
    %586 = arith.mulf %585, %441 : vector<1x24xf32>
    %587 = arith.addf %583, %586 : vector<1x24xf32>
    %588 = arith.addf %564, %587 : vector<1x24xf32>
    %589 = arith.negf %588 : vector<1x24xf32>
    %590 = math.exp %589 : vector<1x24xf32>
    %cst_23 = arith.constant 1.000000e+00 : f32
    %591 = vector.broadcast %cst_23 : f32 to vector<1x24xf32>
    %592 = arith.addf %591, %590 : vector<1x24xf32>
    %593 = arith.divf %591, %592 : vector<1x24xf32>
    %594 = vector.extract_strided_slice %593 {offsets = [0, 0], sizes = [1, 6], strides = [1, 1]} : vector<1x24xf32> to vector<1x6xf32>
    %595 = vector.extract_strided_slice %593 {offsets = [0, 6], sizes = [1, 6], strides = [1, 1]} : vector<1x24xf32> to vector<1x6xf32>
    %596 = vector.extract_strided_slice %593 {offsets = [0, 18], sizes = [1, 6], strides = [1, 1]} : vector<1x24xf32> to vector<1x6xf32>
    %597 = vector.extract_strided_slice %588 {offsets = [0, 12], sizes = [1, 6], strides = [1, 1]} : vector<1x24xf32> to vector<1x6xf32>
    %598 = math.tanh %597 : vector<1x6xf32>
    %599 = arith.mulf %595, %561 : vector<1x6xf32>
    %600 = arith.mulf %594, %598 : vector<1x6xf32>
    %601 = arith.addf %599, %600 : vector<1x6xf32>
    %602 = math.tanh %601 : vector<1x6xf32>
    %603 = arith.mulf %596, %602 : vector<1x6xf32>
    %604 = tpu.concatenate %483, %523, %563, %603 in 0 : vector<1x6xf32>, vector<1x6xf32>, vector<1x6xf32>, vector<1x6xf32> -> vector<4x6xf32>
    %605 = vector.extract_strided_slice %604 {offsets = [0, 0], sizes = [4, 1], strides = [1, 1]} : vector<4x6xf32> to vector<4x1xf32>
    %606 = vector.extract_strided_slice %8 {offsets = [0, 0], sizes = [1, 3], strides = [1, 1]} : vector<6x3xf32> to vector<1x3xf32>
    %607 = vector.broadcast %605 : vector<4x1xf32> to vector<4x3xf32>
    %608 = vector.broadcast %606 : vector<1x3xf32> to vector<4x3xf32>
    %609 = arith.mulf %607, %608 : vector<4x3xf32>
    %610 = vector.extract_strided_slice %604 {offsets = [0, 1], sizes = [4, 1], strides = [1, 1]} : vector<4x6xf32> to vector<4x1xf32>
    %611 = vector.extract_strided_slice %8 {offsets = [1, 0], sizes = [1, 3], strides = [1, 1]} : vector<6x3xf32> to vector<1x3xf32>
    %612 = vector.broadcast %610 : vector<4x1xf32> to vector<4x3xf32>
    %613 = vector.broadcast %611 : vector<1x3xf32> to vector<4x3xf32>
    %614 = arith.mulf %612, %613 : vector<4x3xf32>
    %615 = arith.addf %609, %614 : vector<4x3xf32>
    %616 = vector.extract_strided_slice %604 {offsets = [0, 2], sizes = [4, 1], strides = [1, 1]} : vector<4x6xf32> to vector<4x1xf32>
    %617 = vector.extract_strided_slice %8 {offsets = [2, 0], sizes = [1, 3], strides = [1, 1]} : vector<6x3xf32> to vector<1x3xf32>
    %618 = vector.broadcast %616 : vector<4x1xf32> to vector<4x3xf32>
    %619 = vector.broadcast %617 : vector<1x3xf32> to vector<4x3xf32>
    %620 = arith.mulf %618, %619 : vector<4x3xf32>
    %621 = arith.addf %615, %620 : vector<4x3xf32>
    %622 = vector.extract_strided_slice %604 {offsets = [0, 3], sizes = [4, 1], strides = [1, 1]} : vector<4x6xf32> to vector<4x1xf32>
    %623 = vector.extract_strided_slice %8 {offsets = [3, 0], sizes = [1, 3], strides = [1, 1]} : vector<6x3xf32> to vector<1x3xf32>
    %624 = vector.broadcast %622 : vector<4x1xf32> to vector<4x3xf32>
    %625 = vector.broadcast %623 : vector<1x3xf32> to vector<4x3xf32>
    %626 = arith.mulf %624, %625 : vector<4x3xf32>
    %627 = arith.addf %621, %626 : vector<4x3xf32>
    %628 = vector.extract_strided_slice %604 {offsets = [0, 4], sizes = [4, 1], strides = [1, 1]} : vector<4x6xf32> to vector<4x1xf32>
    %629 = vector.extract_strided_slice %8 {offsets = [4, 0], sizes = [1, 3], strides = [1, 1]} : vector<6x3xf32> to vector<1x3xf32>
    %630 = vector.broadcast %628 : vector<4x1xf32> to vector<4x3xf32>
    %631 = vector.broadcast %629 : vector<1x3xf32> to vector<4x3xf32>
    %632 = arith.mulf %630, %631 : vector<4x3xf32>
    %633 = arith.addf %627, %632 : vector<4x3xf32>
    %634 = vector.extract_strided_slice %604 {offsets = [0, 5], sizes = [4, 1], strides = [1, 1]} : vector<4x6xf32> to vector<4x1xf32>
    %635 = vector.extract_strided_slice %8 {offsets = [5, 0], sizes = [1, 3], strides = [1, 1]} : vector<6x3xf32> to vector<1x3xf32>
    %636 = vector.broadcast %634 : vector<4x1xf32> to vector<4x3xf32>
    %637 = vector.broadcast %635 : vector<1x3xf32> to vector<4x3xf32>
    %638 = arith.mulf %636, %637 : vector<4x3xf32>
    %639 = arith.addf %633, %638 : vector<4x3xf32>
    %640 = vector.broadcast %9 : vector<1x3xf32> to vector<4x3xf32>
    %641 = arith.addf %639, %640 : vector<4x3xf32>
    %cst_24 = arith.constant dense<0xFF800000> : vector<4xf32>
    %642 = vector.multi_reduction <maximumf>, %641, %cst_24 [1] : vector<4x3xf32> to vector<4xf32>
    %643 = vector.shape_cast %642 : vector<4xf32> to vector<4x1xf32>
    %644 = vector.broadcast %643 : vector<4x1xf32> to vector<4x3xf32>
    %645 = arith.subf %641, %644 : vector<4x3xf32>
    %646 = math.exp %645 : vector<4x3xf32>
    %cst_25 = arith.constant dense<0.000000e+00> : vector<4xf32>
    %647 = vector.multi_reduction <add>, %646, %cst_25 [1] : vector<4x3xf32> to vector<4xf32>
    %648 = vector.shape_cast %647 : vector<4xf32> to vector<4x1xf32>
    %649 = math.log %648 : vector<4x1xf32>
    %650 = arith.addf %643, %649 : vector<4x1xf32>
    %651 = vector.broadcast %650 : vector<4x1xf32> to vector<4x3xf32>
    %652 = arith.subf %641, %651 : vector<4x3xf32>
    %c0_26 = arith.constant 0 : index
    %c0_27 = arith.constant 0 : index
    %653 = vector.load %arg4[%c0_26, %c0_27] : memref<4x3xf32, #tpu.memory_space<vmem>>, vector<4x3xf32>
    tpu.vector_store %arg4[%c0_26, %c0_27], %652 {strides = array<i32>} : memref<4x3xf32, #tpu.memory_space<vmem>>, vector<4x3xf32>,
    return
  }
}

</mosaic_0001>

<llo_original>
// kernel: lstm_tagger_forward.1
$region0: #{lstm_tagger_forward.1}
  #allocation0 [shape = 'u32[]', space=smem, size = 0x4, offset = 0x4, fixed_abs, tag = 'smem constant byte address 0x4 - core index']
  #allocation1 [shape = 'u32[144,128]{1,0:T(1,128)}', space=vmem, size = 0x12000, scoped, tag = 'internal scratch']
  %s0 = inlined_call_operand.vmem [shape: s32[4,1], index: 0, kind: input, shape index: {}]
  %s1 = inlined_call_operand.vmem [shape: f32[9,4,3], index: 1, kind: input, shape index: {}]
  %s2 = inlined_call_operand.vmem [shape: f32[4,6], index: 2, kind: input, shape index: {}]
  %s3 = inlined_call_operand.vmem [shape: f32[30,24], index: 3, kind: input, shape index: {}]
  %s4 = inlined_call_operand.hbm [shape: f32[4,3], index: 4, kind: output, shape index: {}]
  %s5 = sld [smem:[#allocation0]]
  $region26: #{lstm_tagger_forward.1} parent=0
    _
  %s7 = ssub.s32 1, %s5
  %s8 = scalar_select 0, %s7, %s5
  $region1: #{lstm_tagger_forward.1} parent=0
    #allocation2 [shape = 'u8[2048]{0}', space=vmem, size = 0x800, scoped, tag = 'output window, operand 0, single buffered']
    #allocation3 [shape = 's32[1]{0}', space=sflag, size = 0x4, scoped, tag = 'scoped memory for lstm_tagger_forward.1']
    %9 = vsyncpa [#allocation3], 0
    // Predicated region
    $region2: #{lstm_tagger_forward.1} parent=1 // pred_check
      _
    $region3: #{lstm_tagger_forward.1} parent=1 // pred_check_branch
      %11 = sbr.rel (0) target = $region5
    $region4: #{lstm_tagger_forward.1} parent=1 // pred_region
      _
    $region5: #{lstm_tagger_forward.1} parent=1 // pred_fallthru
      _
    // Predicated region
    $region6: #{lstm_tagger_forward.1} parent=1 // pred_check
      _
    $region7: #{lstm_tagger_forward.1} parent=1 // pred_check_branch
      %13 = sbr.rel (0) target = $region9
    $region8: #{lstm_tagger_forward.1} parent=1 // pred_region
      _
    $region9: #{lstm_tagger_forward.1} parent=1 // pred_fallthru
      _
    // Predicated region
    $region10: #{lstm_tagger_forward.1} parent=1 // pred_check
      _
    $region11: #{lstm_tagger_forward.1} parent=1 // pred_check_branch
      %15 = sbr.rel (0) target = $region13
    $region12: #{lstm_tagger_forward.1} parent=1 // pred_region
      _
    $region13: #{lstm_tagger_forward.1} parent=1 // pred_fallthru
      _
    // Predicated region
    $region14: #{lstm_tagger_forward.1} parent=1 // pred_check
      _
    $region15: #{lstm_tagger_forward.1} parent=1 // pred_check_branch
      %17 = sbr.rel (0) target = $region17
    $region16: #{lstm_tagger_forward.1} parent=1 // pred_region
      _
    $region17: #{lstm_tagger_forward.1} parent=1 // pred_fallthru
      _
    %v18 = vld [vmem:[%s3] sm:$0xff]
    %v19 = vld [vmem:[%s3 + $0x8] sm:$0xff]
    %v20 = vld [vmem:[%s3 + $0x10] sm:$0xff]
    %v21 = vld [vmem:[%s3 + $0x18] sm:$0x3f]
    %v22 = vld [vmem:[%s1] sm:$0xf]
    %v23 = vld [vmem:[%s1 + $0x4] sm:$0xf]
    %v24 = vld [vmem:[%s1 + $0x8] sm:$0xf]
    %v25 = vld [vmem:[%s1 + $0xc] sm:$0xf]
    %v26 = vld [vmem:[%s1 + $0x10] sm:$0xf]
    %v27 = vld [vmem:[%s1 + $0x14] sm:$0xf]
    %v28 = vld [vmem:[%s1 + $0x18] sm:$0xf]
    %v29 = vld [vmem:[%s1 + $0x1c] sm:$0xf]
    %v30 = vld [vmem:[%s1 + $0x20] sm:$0xf]
    %v31 = vld [vmem:[%s0] sm:$0xf]
    %vm32 = vcmp.gt.s32.totalorder %v31, 0
    %vm33 = vcmp.gt.s32.totalorder %v31, 1
    %vm34 = vcmp.gt.s32.totalorder %v31, 2
    %vm35 = vcmp.gt.s32.totalorder %v31, 3
    %vm36 = vcmp.gt.s32.totalorder %v31, 4
    %vm37 = vcmp.gt.s32.totalorder %v31, 5
    %vm38 = vcmp.gt.s32.totalorder %v31, 6
    %vm39 = vcmp.gt.s32.totalorder %v31, 7
    %vm40 = vcmp.gt.s32.totalorder %v31, 8
    %42 = vset.pattern.permute.xlu0 0
    %43 = vperm.xlu0 %42, %v22
    %v44 = vpop.permute.xlu0 %43
    %47 = vset.pattern.permute.xlu0 0
    %48 = vperm.xlu0 %47, %v23
    %v49 = vpop.permute.xlu0 %48
    %52 = vset.pattern.permute.xlu0 0
    %53 = vperm.xlu0 %52, %v24
    %v54 = vpop.permute.xlu0 %53
    %57 = vset.pattern.permute.xlu0 0
    %58 = vperm.xlu0 %57, %v25
    %v59 = vpop.permute.xlu0 %58
    %62 = vset.pattern.permute.xlu0 0
    %63 = vperm.xlu0 %62, %v26
    %v64 = vpop.permute.xlu0 %63
    %67 = vset.pattern.permute.xlu0 0
    %68 = vperm.xlu0 %67, %v27
    %v69 = vpop.permute.xlu0 %68
    %72 = vset.pattern.permute.xlu0 0
    %73 = vperm.xlu0 %72, %v28
    %v74 = vpop.permute.xlu0 %73
    %77 = vset.pattern.permute.xlu0 0
    %78 = vperm.xlu0 %77, %v29
    %v79 = vpop.permute.xlu0 %78
    %82 = vset.pattern.permute.xlu0 0
    %83 = vperm.xlu0 %82, %v30
    %v84 = vpop.permute.xlu0 %83
    %v86 = vlaneseq
    %v87 = vshrl.u32 %v86, 7
    %v88 = vsub.s32 0, %v87
    %v89 = vrot.slane %v18, %v88
    %v90 = vmul.f32 %v44, %v89
    %v91 = vmul.f32 %v49, %v89
    %v92 = vmul.f32 %v54, %v89
    %v93 = vmul.f32 %v59, %v89
    %v94 = vmul.f32 %v64, %v89
    %v95 = vmul.f32 %v69, %v89
    %v96 = vmul.f32 %v74, %v89
    %v97 = vmul.f32 %v79, %v89
    %v98 = vmul.f32 %v84, %v89
    %99 = vset.pattern.permute.xlu0 1
    %100 = vperm.xlu0 %99, %v22
    %v101 = vpop.permute.xlu0 %100
    %103 = vset.pattern.permute.xlu0 1
    %104 = vperm.xlu0 %103, %v23
    %v105 = vpop.permute.xlu0 %104
    %107 = vset.pattern.permute.xlu0 1
    %108 = vperm.xlu0 %107, %v24
    %v109 = vpop.permute.xlu0 %108
    %111 = vset.pattern.permute.xlu0 1
    %112 = vperm.xlu0 %111, %v25
    %v113 = vpop.permute.xlu0 %112
    %115 = vset.pattern.permute.xlu0 1
    %116 = vperm.xlu0 %115, %v26
    %v117 = vpop.permute.xlu0 %116
    %119 = vset.pattern.permute.xlu0 1
    %120 = vperm.xlu0 %119, %v27
    %v121 = vpop.permute.xlu0 %120
    %123 = vset.pattern.permute.xlu0 1
    %124 = vperm.xlu0 %123, %v28
    %v125 = vpop.permute.xlu0 %124
    %127 = vset.pattern.permute.xlu0 1
    %128 = vperm.xlu0 %127, %v29
    %v129 = vpop.permute.xlu0 %128
    %131 = vset.pattern.permute.xlu0 1
    %132 = vperm.xlu0 %131, %v30
    %v133 = vpop.permute.xlu0 %132
    %v135 = vlaneseq
    %v136 = vshrl.u32 %v135, 7
    %v137 = vsub.s32 1, %v136
    %v138 = vrot.slane %v18, %v137
    %v139 = vmul.f32 %v101, %v138
    %v140 = vmul.f32 %v105, %v138
    %v141 = vmul.f32 %v109, %v138
    %v142 = vmul.f32 %v113, %v138
    %v143 = vmul.f32 %v117, %v138
    %v144 = vmul.f32 %v121, %v138
    %v145 = vmul.f32 %v125, %v138
    %v146 = vmul.f32 %v129, %v138
    %v147 = vmul.f32 %v133, %v138
    %v148 = vadd.f32 %v90, %v139
    %v149 = vadd.f32 %v91, %v140
    %v150 = vadd.f32 %v92, %v141
    %v151 = vadd.f32 %v93, %v142
    %v152 = vadd.f32 %v94, %v143
    %v153 = vadd.f32 %v95, %v144
    %v154 = vadd.f32 %v96, %v145
    %v155 = vadd.f32 %v97, %v146
    %v156 = vadd.f32 %v98, %v147
    %157 = vset.pattern.permute.xlu0 2
    %158 = vperm.xlu0 %157, %v22
    %v159 = vpop.permute.xlu0 %158
    %161 = vset.pattern.permute.xlu0 2
    %162 = vperm.xlu0 %161, %v23
    %v163 = vpop.permute.xlu0 %162
    %165 = vset.pattern.permute.xlu0 2
    %166 = vperm.xlu0 %165, %v24
    %v167 = vpop.permute.xlu0 %166
    %169 = vset.pattern.permute.xlu0 2
    %170 = vperm.xlu0 %169, %v25
    %v171 = vpop.permute.xlu0 %170
    %173 = vset.pattern.permute.xlu0 2
    %174 = vperm.xlu0 %173, %v26
    %v175 = vpop.permute.xlu0 %174
    %177 = vset.pattern.permute.xlu0 2
    %178 = vperm.xlu0 %177, %v27
    %v179 = vpop.permute.xlu0 %178
    %181 = vset.pattern.permute.xlu0 2
    %182 = vperm.xlu0 %181, %v28
    %v183 = vpop.permute.xlu0 %182
    %185 = vset.pattern.permute.xlu0 2
    %186 = vperm.xlu0 %185, %v29
    %v187 = vpop.permute.xlu0 %186
    %189 = vset.pattern.permute.xlu0 2
    %190 = vperm.xlu0 %189, %v30
    %v191 = vpop.permute.xlu0 %190
    %v193 = vlaneseq
    %v194 = vshrl.u32 %v193, 7
    %v195 = vsub.s32 2, %v194
    %v196 = vrot.slane %v18, %v195
    %v197 = vmul.f32 %v159, %v196
    %v198 = vmul.f32 %v163, %v196
    %v199 = vmul.f32 %v167, %v196
    %v200 = vmul.f32 %v171, %v196
    %v201 = vmul.f32 %v175, %v196
    %v202 = vmul.f32 %v179, %v196
    %v203 = vmul.f32 %v183, %v196
    %v204 = vmul.f32 %v187, %v196
    %v205 = vmul.f32 %v191, %v196
    %v206 = vadd.f32 %v148, %v197
    %v207 = vadd.f32 %v149, %v198
    %v208 = vadd.f32 %v150, %v199
    %v209 = vadd.f32 %v151, %v200
    %v210 = vadd.f32 %v152, %v201
    %v211 = vadd.f32 %v153, %v202
    %v212 = vadd.f32 %v154, %v203
    %v213 = vadd.f32 %v155, %v204
    %v214 = vadd.f32 %v156, %v205
    %v215 = vlaneseq
    %v216 = vshrl.u32 %v215, 7
    %v217 = vsub.s32 6, %v216
    %v218 = vrot.slane %v18, %v217
    %v219 = vadd.f32 %v206, %v218
    %v220 = vadd.f32 %v207, %v218
    %v221 = vadd.f32 %v208, %v218
    %v222 = vadd.f32 %v209, %v218
    %v223 = vadd.f32 %v210, %v218
    %v224 = vadd.f32 %v211, %v218
    %v225 = vadd.f32 %v212, %v218
    %v226 = vadd.f32 %v213, %v218
    %v227 = vadd.f32 %v214, %v218
    %v228 = vlaneseq
    %v229 = vshrl.u32 %v228, 7
    %v230 = vsub.s32 3, %v229
    %v231 = vrot.slane %v18, %v230
    %v232 = vlaneseq
    %v233 = vshrl.u32 %v232, 7
    %v234 = vsub.s32 4, %v233
    %v235 = vrot.slane %v18, %v234
    %v236 = vlaneseq
    %v237 = vshrl.u32 %v236, 7
    %v238 = vsub.s32 5, %v237
    %v239 = vrot.slane %v18, %v238
    %v240 = vmul.f32 %v231, 0.0
    %v241 = vmul.f32 %v235, 0.0
    %v242 = vadd.f32 %v240, %v241
    %v243 = vmul.f32 %v239, 0.0
    %v244 = vadd.f32 %v242, %v243
    %v245 = vadd.f32 %v219, %v244
    %v246 = vxor.u32 %v245, 2147483648
    %v247 = vmul.f32 %v246, 1.442695
    %v248 = vpow.pop %v247
    %v249 = vadd.f32 %v248, 1.0
    %v250 = vrcp.pop %v249
    %v251 = vmul.f32 1.0, %v250
    %v252 = vtanh.pop %v245
    %v253 = vmul.f32 %v251, 0.0
    %255 = vrot.lane.b32.xlu0 %v252, 122
    %v256 = vpop.permute.xlu0 %255
    %v258 = vmul.f32 %v251, %v256
    %260 = vrot.lane.b32.xlu0 %v258, 3
    %v261 = vpop.permute.xlu0 %260
    %v263 = vadd.f32 %v253, %v261
    %v264 = vtanh.pop %v263
    %266 = vrot.lane.b32.xlu0 %v264, 6
    %v267 = vpop.permute.xlu0 %266
    %v269 = vmul.f32 %v251, %v267
    %v270 = vsel %vm32, 1, 0
    %271 = vset.pattern.permute.xlu0 0
    %272 = vperm.xlu0 %271, %v270
    %v273 = vpop.permute.xlu0 %272
    %vm274 = vcmp.eq.s32.totalorder %v273, 1
    %v275 = vsel %vm274, %v269, 0.0
    %v276 = vsel %vm274, %v263, 0.0
    %278 = vset.pattern.permute.xlu0 9
    %279 = vperm.xlu0 %278, %v275
    %v280 = vpop.permute.xlu0 %279
    %v282 = vmul.f32 %v280, %v231
    %283 = vset.pattern.permute.xlu0 10
    %284 = vperm.xlu0 %283, %v275
    %v285 = vpop.permute.xlu0 %284
    %v287 = vmul.f32 %v285, %v235
    %v288 = vadd.f32 %v282, %v287
    %289 = vset.pattern.permute.xlu0 11
    %290 = vperm.xlu0 %289, %v275
    %v291 = vpop.permute.xlu0 %290
    %v293 = vmul.f32 %v291, %v239
    %v294 = vadd.f32 %v288, %v293
    %v295 = vadd.f32 %v220, %v294
    %v296 = vxor.u32 %v295, 2147483648
    %v297 = vmul.f32 %v296, 1.442695
    %v298 = vpow.pop %v297
    %v299 = vadd.f32 %v298, 1.0
    %v300 = vrcp.pop %v299
    %v301 = vmul.f32 1.0, %v300
    %v302 = vtanh.pop %v295
    %v303 = vmul.f32 %v301, %v276
    %305 = vrot.lane.b32.xlu0 %v302, 122
    %v306 = vpop.permute.xlu0 %305
    %v308 = vmul.f32 %v301, %v306
    %310 = vrot.lane.b32.xlu0 %v308, 3
    %v311 = vpop.permute.xlu0 %310
    %v313 = vadd.f32 %v303, %v311
    %v314 = vtanh.pop %v313
    %316 = vrot.lane.b32.xlu0 %v314, 6
    %v317 = vpop.permute.xlu0 %316
    %v319 = vmul.f32 %v301, %v317
    %v320 = vsel %vm33, 1, 0
    %321 = vset.pattern.permute.xlu0 0
    %322 = vperm.xlu0 %321, %v320
    %v323 = vpop.permute.xlu0 %322
    %vm324 = vcmp.eq.s32.totalorder %v323, 1
    %v325 = vsel %vm324, %v319, %v275
    %v326 = vsel %vm324, %v313, %v276
    %328 = vset.pattern.permute.xlu0 9
    %329 = vperm.xlu0 %328, %v325
    %v330 = vpop.permute.xlu0 %329
    %v332 = vmul.f32 %v330, %v231
    %333 = vset.pattern.permute.xlu0 10
    %334 = vperm.xlu0 %333, %v325
    %v335 = vpop.permute.xlu0 %334
    %v337 = vmul.f32 %v335, %v235
    %v338 = vadd.f32 %v332, %v337
    %339 = vset.pattern.permute.xlu0 11
    %340 = vperm.xlu0 %339, %v325
    %v341 = vpop.permute.xlu0 %340
    %v343 = vmul.f32 %v341, %v239
    %v344 = vadd.f32 %v338, %v343
    %v345 = vadd.f32 %v221, %v344
    %v346 = vxor.u32 %v345, 2147483648
    %v347 = vmul.f32 %v346, 1.442695
    %v348 = vpow.pop %v347
    %v349 = vadd.f32 %v348, 1.0
    %v350 = vrcp.pop %v349
    %v351 = vmul.f32 1.0, %v350
    %v352 = vtanh.pop %v345
    %v353 = vmul.f32 %v351, %v326
    %355 = vrot.lane.b32.xlu0 %v352, 122
    %v356 = vpop.permute.xlu0 %355
    %v358 = vmul.f32 %v351, %v356
    %360 = vrot.lane.b32.xlu0 %v358, 3
    %v361 = vpop.permute.xlu0 %360
    %v363 = vadd.f32 %v353, %v361
    %v364 = vtanh.pop %v363
    %366 = vrot.lane.b32.xlu0 %v364, 6
    %v367 = vpop.permute.xlu0 %366
    %v369 = vmul.f32 %v351, %v367
    %v370 = vsel %vm34, 1, 0
    %371 = vset.pattern.permute.xlu0 0
    %372 = vperm.xlu0 %371, %v370
    %v373 = vpop.permute.xlu0 %372
    %vm374 = vcmp.eq.s32.totalorder %v373, 1
    %v375 = vsel %vm374, %v369, %v325
    %v376 = vsel %vm374, %v363, %v326
    %378 = vset.pattern.permute.xlu0 9
    %379 = vperm.xlu0 %378, %v375
    %v380 = vpop.permute.xlu0 %379
    %v382 = vmul.f32 %v380, %v231
    %383 = vset.pattern.permute.xlu0 10
    %384 = vperm.xlu0 %383, %v375
    %v385 = vpop.permute.xlu0 %384
    %v387 = vmul.f32 %v385, %v235
    %v388 = vadd.f32 %v382, %v387
    %389 = vset.pattern.permute.xlu0 11
    %390 = vperm.xlu0 %389, %v375
    %v391 = vpop.permute.xlu0 %390
    %v393 = vmul.f32 %v391, %v239
    %v394 = vadd.f32 %v388, %v393
    %v395 = vadd.f32 %v222, %v394
    %v396 = vxor.u32 %v395, 2147483648
    %v397 = vmul.f32 %v396, 1.442695
    %v398 = vpow.pop %v397
    %v399 = vadd.f32 %v398, 1.0
    %v400 = vrcp.pop %v399
    %v401 = vmul.f32 1.0, %v400
    %v402 = vtanh.pop %v395
    %v403 = vmul.f32 %v401, %v376
    %405 = vrot.lane.b32.xlu0 %v402, 122
    %v406 = vpop.permute.xlu0 %405
    %v408 = vmul.f32 %v401, %v406
    %410 = vrot.lane.b32.xlu0 %v408, 3
    %v411 = vpop.permute.xlu0 %410
    %v413 = vadd.f32 %v403, %v411
    %v414 = vtanh.pop %v413
    %416 = vrot.lane.b32.xlu0 %v414, 6
    %v417 = vpop.permute.xlu0 %416
    %v419 = vmul.f32 %v401, %v417
    %v420 = vsel %vm35, 1, 0
    %421 = vset.pattern.permute.xlu0 0
    %422 = vperm.xlu0 %421, %v420
    %v423 = vpop.permute.xlu0 %422
    %vm424 = vcmp.eq.s32.totalorder %v423, 1
    %v425 = vsel %vm424, %v419, %v375
    %v426 = vsel %vm424, %v413, %v376
    %428 = vset.pattern.permute.xlu0 9
    %429 = vperm.xlu0 %428, %v425
    %v430 = vpop.permute.xlu0 %429
    %v432 = vmul.f32 %v430, %v231
    %433 = vset.pattern.permute.xlu0 10
    %434 = vperm.xlu0 %433, %v425
    %v435 = vpop.permute.xlu0 %434
    %v437 = vmul.f32 %v435, %v235
    %v438 = vadd.f32 %v432, %v437
    %439 = vset.pattern.permute.xlu0 11
    %440 = vperm.xlu0 %439, %v425
    %v441 = vpop.permute.xlu0 %440
    %v443 = vmul.f32 %v441, %v239
    %v444 = vadd.f32 %v438, %v443
    %v445 = vadd.f32 %v223, %v444
    %v446 = vxor.u32 %v445, 2147483648
    %v447 = vmul.f32 %v446, 1.442695
    %v448 = vpow.pop %v447
    %v449 = vadd.f32 %v448, 1.0
    %v450 = vrcp.pop %v449
    %v451 = vmul.f32 1.0, %v450
    %v452 = vtanh.pop %v445
    %v453 = vmul.f32 %v451, %v426
    %455 = vrot.lane.b32.xlu0 %v452, 122
    %v456 = vpop.permute.xlu0 %455
    %v458 = vmul.f32 %v451, %v456
    %460 = vrot.lane.b32.xlu0 %v458, 3
    %v461 = vpop.permute.xlu0 %460
    %v463 = vadd.f32 %v453, %v461
    %v464 = vtanh.pop %v463
    %466 = vrot.lane.b32.xlu0 %v464, 6
    %v467 = vpop.permute.xlu0 %466
    %v469 = vmul.f32 %v451, %v467
    %v470 = vsel %vm36, 1, 0
    %471 = vset.pattern.permute.xlu0 0
    %472 = vperm.xlu0 %471, %v470
    %v473 = vpop.permute.xlu0 %472
    %vm474 = vcmp.eq.s32.totalorder %v473, 1
    %v475 = vsel %vm474, %v469, %v425
    %v476 = vsel %vm474, %v463, %v426
    %478 = vset.pattern.permute.xlu0 9
    %479 = vperm.xlu0 %478, %v475
    %v480 = vpop.permute.xlu0 %479
    %v482 = vmul.f32 %v480, %v231
    %483 = vset.pattern.permute.xlu0 10
    %484 = vperm.xlu0 %483, %v475
    %v485 = vpop.permute.xlu0 %484
    %v487 = vmul.f32 %v485, %v235
    %v488 = vadd.f32 %v482, %v487
    %489 = vset.pattern.permute.xlu0 11
    %490 = vperm.xlu0 %489, %v475
    %v491 = vpop.permute.xlu0 %490
    %v493 = vmul.f32 %v491, %v239
    %v494 = vadd.f32 %v488, %v493
    %v495 = vadd.f32 %v224, %v494
    %v496 = vxor.u32 %v495, 2147483648
    %v497 = vmul.f32 %v496, 1.442695
    %v498 = vpow.pop %v497
    %v499 = vadd.f32 %v498, 1.0
    %v500 = vrcp.pop %v499
    %v501 = vmul.f32 1.0, %v500
    %v502 = vtanh.pop %v495
    %v503 = vmul.f32 %v501, %v476
    %505 = vrot.lane.b32.xlu0 %v502, 122
    %v506 = vpop.permute.xlu0 %505
    %v508 = vmul.f32 %v501, %v506
    %510 = vrot.lane.b32.xlu0 %v508, 3
    %v511 = vpop.permute.xlu0 %510
    %v513 = vadd.f32 %v503, %v511
    %v514 = vtanh.pop %v513
    %516 = vrot.lane.b32.xlu0 %v514, 6
    %v517 = vpop.permute.xlu0 %516
    %v519 = vmul.f32 %v501, %v517
    %v520 = vsel %vm37, 1, 0
    %521 = vset.pattern.permute.xlu0 0
    %522 = vperm.xlu0 %521, %v520
    %v523 = vpop.permute.xlu0 %522
    %vm524 = vcmp.eq.s32.totalorder %v523, 1
    %v525 = vsel %vm524, %v519, %v475
    %v526 = vsel %vm524, %v513, %v476
    %528 = vset.pattern.permute.xlu0 9
    %529 = vperm.xlu0 %528, %v525
    %v530 = vpop.permute.xlu0 %529
    %v532 = vmul.f32 %v530, %v231
    %533 = vset.pattern.permute.xlu0 10
    %534 = vperm.xlu0 %533, %v525
    %v535 = vpop.permute.xlu0 %534
    %v537 = vmul.f32 %v535, %v235
    %v538 = vadd.f32 %v532, %v537
    %539 = vset.pattern.permute.xlu0 11
    %540 = vperm.xlu0 %539, %v525
    %v541 = vpop.permute.xlu0 %540
    %v543 = vmul.f32 %v541, %v239
    %v544 = vadd.f32 %v538, %v543
    %v545 = vadd.f32 %v225, %v544
    %v546 = vxor.u32 %v545, 2147483648
    %v547 = vmul.f32 %v546, 1.442695
    %v548 = vpow.pop %v547
    %v549 = vadd.f32 %v548, 1.0
    %v550 = vrcp.pop %v549
    %v551 = vmul.f32 1.0, %v550
    %v552 = vtanh.pop %v545
    %v553 = vmul.f32 %v551, %v526
    %555 = vrot.lane.b32.xlu0 %v552, 122
    %v556 = vpop.permute.xlu0 %555
    %v558 = vmul.f32 %v551, %v556
    %560 = vrot.lane.b32.xlu0 %v558, 3
    %v561 = vpop.permute.xlu0 %560
    %v563 = vadd.f32 %v553, %v561
    %v564 = vtanh.pop %v563
    %566 = vrot.lane.b32.xlu0 %v564, 6
    %v567 = vpop.permute.xlu0 %566
    %v569 = vmul.f32 %v551, %v567
    %v570 = vsel %vm38, 1, 0
    %571 = vset.pattern.permute.xlu0 0
    %572 = vperm.xlu0 %571, %v570
    %v573 = vpop.permute.xlu0 %572
    %vm574 = vcmp.eq.s32.totalorder %v573, 1
    %v575 = vsel %vm574, %v569, %v525
    %v576 = vsel %vm574, %v563, %v526
    %578 = vset.pattern.permute.xlu0 9
    %579 = vperm.xlu0 %578, %v575
    %v580 = vpop.permute.xlu0 %579
    %v582 = vmul.f32 %v580, %v231
    %583 = vset.pattern.permute.xlu0 10
    %584 = vperm.xlu0 %583, %v575
    %v585 = vpop.permute.xlu0 %584
    %v587 = vmul.f32 %v585, %v235
    %v588 = vadd.f32 %v582, %v587
    %589 = vset.pattern.permute.xlu0 11
    %590 = vperm.xlu0 %589, %v575
    %v591 = vpop.permute.xlu0 %590
    %v593 = vmul.f32 %v591, %v239
    %v594 = vadd.f32 %v588, %v593
    %v595 = vadd.f32 %v226, %v594
    %v596 = vxor.u32 %v595, 2147483648
    %v597 = vmul.f32 %v596, 1.442695
    %v598 = vpow.pop %v597
    %v599 = vadd.f32 %v598, 1.0
    %v600 = vrcp.pop %v599
    %v601 = vmul.f32 1.0, %v600
    %v602 = vtanh.pop %v595
    %v603 = vmul.f32 %v601, %v576
    %605 = vrot.lane.b32.xlu0 %v602, 122
    %v606 = vpop.permute.xlu0 %605
    %v608 = vmul.f32 %v601, %v606
    %610 = vrot.lane.b32.xlu0 %v608, 3
    %v611 = vpop.permute.xlu0 %610
    %v613 = vadd.f32 %v603, %v611
    %v614 = vtanh.pop %v613
    %616 = vrot.lane.b32.xlu0 %v614, 6
    %v617 = vpop.permute.xlu0 %616
    %v619 = vmul.f32 %v601, %v617
    %v620 = vsel %vm39, 1, 0
    %621 = vset.pattern.permute.xlu0 0
    %622 = vperm.xlu0 %621, %v620
    %v623 = vpop.permute.xlu0 %622
    %vm624 = vcmp.eq.s32.totalorder %v623, 1
    %v625 = vsel %vm624, %v619, %v575
    %v626 = vsel %vm624, %v613, %v576
    %628 = vset.pattern.permute.xlu0 9
    %629 = vperm.xlu0 %628, %v625
    %v630 = vpop.permute.xlu0 %629
    %v632 = vmul.f32 %v630, %v231
    %633 = vset.pattern.permute.xlu0 10
    %634 = vperm.xlu0 %633, %v625
    %v635 = vpop.permute.xlu0 %634
    %v637 = vmul.f32 %v635, %v235
    %v638 = vadd.f32 %v632, %v637
    %639 = vset.pattern.permute.xlu0 11
    %640 = vperm.xlu0 %639, %v625
    %v641 = vpop.permute.xlu0 %640
    %v643 = vmul.f32 %v641, %v239
    %v644 = vadd.f32 %v638, %v643
    %v645 = vadd.f32 %v227, %v644
    %v646 = vxor.u32 %v645, 2147483648
    %v647 = vmul.f32 %v646, 1.442695
    %v648 = vpow.pop %v647
    %v649 = vadd.f32 %v648, 1.0
    %v650 = vrcp.pop %v649
    %v651 = vmul.f32 1.0, %v650
    %v652 = vtanh.pop %v645
    %v653 = vmul.f32 %v651, %v626
    %655 = vrot.lane.b32.xlu0 %v652, 122
    %v656 = vpop.permute.xlu0 %655
    %v658 = vmul.f32 %v651, %v656
    %660 = vrot.lane.b32.xlu0 %v658, 3
    %v661 = vpop.permute.xlu0 %660
    %v663 = vadd.f32 %v653, %v661
    %v664 = vtanh.pop %v663
    %666 = vrot.lane.b32.xlu0 %v664, 6
    %v667 = vpop.permute.xlu0 %666
    %v669 = vmul.f32 %v651, %v667
    %v670 = vsel %vm40, 1, 0
    %671 = vset.pattern.permute.xlu0 0
    %672 = vperm.xlu0 %671, %v670
    %v673 = vpop.permute.xlu0 %672
    %vm674 = vcmp.eq.s32.totalorder %v673, 1
    %v675 = vsel %vm674, %v669, %v625
    %v676 = vld [vmem:[%s2] sm:$0xf]
    %678 = vset.pattern.permute.xlu0 0
    %679 = vperm.xlu0 %678, %v676
    %v680 = vpop.permute.xlu0 %679
    %v682 = vlaneseq
    %v683 = vshrl.u32 %v682, 7
    %v684 = vsub.s32 7, %v683
    %v685 = vrot.slane %v18, %v684
    %v686 = vmul.f32 %v680, %v685
    %687 = vset.pattern.permute.xlu0 1
    %688 = vperm.xlu0 %687, %v676
    %v689 = vpop.permute.xlu0 %688
    %v691 = vlaneseq
    %v692 = vshrl.u32 %v691, 7
    %v693 = vsub.s32 0, %v692
    %v694 = vrot.slane %v19, %v693
    %v695 = vmul.f32 %v689, %v694
    %v696 = vadd.f32 %v686, %v695
    %697 = vset.pattern.permute.xlu0 2
    %698 = vperm.xlu0 %697, %v676
    %v699 = vpop.permute.xlu0 %698
    %v701 = vlaneseq
    %v702 = vshrl.u32 %v701, 7
    %v703 = vsub.s32 1, %v702
    %v704 = vrot.slane %v19, %v703
    %v705 = vmul.f32 %v699, %v704
    %v706 = vadd.f32 %v696, %v705
    %707 = vset.pattern.permute.xlu0 3
    %708 = vperm.xlu0 %707, %v676
    %v709 = vpop.permute.xlu0 %708
    %v711 = vlaneseq
    %v712 = vshrl.u32 %v711, 7
    %v713 = vsub.s32 2, %v712
    %v714 = vrot.slane %v19, %v713
    %v715 = vmul.f32 %v709, %v714
    %v716 = vadd.f32 %v706, %v715
    %717 = vset.pattern.permute.xlu0 4
    %718 = vperm.xlu0 %717, %v676
    %v719 = vpop.permute.xlu0 %718
    %v721 = vlaneseq
    %v722 = vshrl.u32 %v721, 7
    %v723 = vsub.s32 3, %v722
    %v724 = vrot.slane %v19, %v723
    %v725 = vmul.f32 %v719, %v724
    %v726 = vadd.f32 %v716, %v725
    %727 = vset.pattern.permute.xlu0 5
    %728 = vperm.xlu0 %727, %v676
    %v729 = vpop.permute.xlu0 %728
    %v731 = vlaneseq
    %v732 = vshrl.u32 %v731, 7
    %v733 = vsub.s32 4, %v732
    %v734 = vrot.slane %v19, %v733
    %v735 = vmul.f32 %v729, %v734
    %v736 = vadd.f32 %v726, %v735
    %738 = vset.pattern.permute.xlu0 9
    %739 = vperm.xlu0 %738, %v675
    %v740 = vpop.permute.xlu0 %739
    %v742 = vlaneseq
    %v743 = vshrl.u32 %v742, 7
    %v744 = vsub.s32 5, %v743
    %v745 = vrot.slane %v19, %v744
    %v746 = vmul.f32 %v740, %v745
    %747 = vset.pattern.permute.xlu0 10
    %748 = vperm.xlu0 %747, %v675
    %v749 = vpop.permute.xlu0 %748
    %v751 = vlaneseq
    %v752 = vshrl.u32 %v751, 7
    %v753 = vsub.s32 6, %v752
    %v754 = vrot.slane %v19, %v753
    %v755 = vmul.f32 %v749, %v754
    %v756 = vadd.f32 %v746, %v755
    %757 = vset.pattern.permute.xlu0 11
    %758 = vperm.xlu0 %757, %v675
    %v759 = vpop.permute.xlu0 %758
    %v761 = vlaneseq
    %v762 = vshrl.u32 %v761, 7
    %v763 = vsub.s32 7, %v762
    %v764 = vrot.slane %v19, %v763
    %v765 = vmul.f32 %v759, %v764
    %v766 = vadd.f32 %v756, %v765
    %v767 = vadd.f32 %v736, %v766
    %v768 = vlaneseq
    %v769 = vshrl.u32 %v768, 7
    %v770 = vsub.s32 6, %v769
    %v771 = vrot.slane %v20, %v770
    %v772 = vadd.f32 %v767, %v771
    %v773 = vmul.f32 %v20, 0.0
    %v775 = vrot.slane %v773, 1
    %v777 = vadd.f32 %v773, %v775
    %v778 = vrot.slane %v773, 2
    %v780 = vadd.f32 %v777, %v778
    %v781 = vrot.slane %v773, 3
    %v783 = vadd.f32 %v780, %v781
    %v784 = vrot.slane %v773, 4
    %v786 = vadd.f32 %v783, %v784
    %v787 = vrot.slane %v773, 5
    %v789 = vadd.f32 %v786, %v787
    %v790 = vadd.f32 %v772, %v789
    %v791 = vxor.u32 %v790, 2147483648
    %v792 = vmul.f32 %v791, 1.442695
    %v793 = vpow.pop %v792
    %v794 = vadd.f32 %v793, 1.0
    %v795 = vrcp.pop %v794
    %v796 = vmul.f32 1.0, %v795
    %v797 = vtanh.pop %v790
    %v798 = vmul.f32 %v796, 0.0
    %800 = vrot.lane.b32.xlu0 %v797, 116
    %v801 = vpop.permute.xlu0 %800
    %v803 = vmul.f32 %v796, %v801
    %805 = vrot.lane.b32.xlu0 %v803, 6
    %v806 = vpop.permute.xlu0 %805
    %v808 = vadd.f32 %v798, %v806
    %v809 = vtanh.pop %v808
    %811 = vrot.lane.b32.xlu0 %v809, 12
    %v812 = vpop.permute.xlu0 %811
    %v814 = vmul.f32 %v796, %v812
    %816 = vset.pattern.permute.xlu0 18
    %817 = vperm.xlu0 %816, %v814
    %v818 = vpop.permute.xlu0 %817
    %v820 = vmul.f32 %v818, %v20
    %821 = vset.pattern.permute.xlu0 19
    %822 = vperm.xlu0 %821, %v814
    %v823 = vpop.permute.xlu0 %822
    %v826 = vrot.slane %v20, 1
    %v828 = vmul.f32 %v823, %v826
    %v829 = vadd.f32 %v820, %v828
    %830 = vset.pattern.permute.xlu0 20
    %831 = vperm.xlu0 %830, %v814
    %v832 = vpop.permute.xlu0 %831
    %v834 = vrot.slane %v20, 2
    %v836 = vmul.f32 %v832, %v834
    %v837 = vadd.f32 %v829, %v836
    %838 = vset.pattern.permute.xlu0 21
    %839 = vperm.xlu0 %838, %v814
    %v840 = vpop.permute.xlu0 %839
    %v842 = vrot.slane %v20, 3
    %v844 = vmul.f32 %v840, %v842
    %v845 = vadd.f32 %v837, %v844
    %846 = vset.pattern.permute.xlu0 22
    %847 = vperm.xlu0 %846, %v814
    %v848 = vpop.permute.xlu0 %847
    %v850 = vrot.slane %v20, 4
    %v852 = vmul.f32 %v848, %v850
    %v853 = vadd.f32 %v845, %v852
    %854 = vset.pattern.permute.xlu0 23
    %855 = vperm.xlu0 %854, %v814
    %v856 = vpop.permute.xlu0 %855
    %v858 = vrot.slane %v20, 5
    %v860 = vmul.f32 %v856, %v858
    %v861 = vadd.f32 %v853, %v860
    %v863 = vrot.slane %v861, 7
    %v865 = vadd.f32 %v772, %v863
    %v866 = vxor.u32 %v865, 2147483648
    %v867 = vmul.f32 %v866, 1.442695
    %v868 = vpow.pop %v867
    %v869 = vadd.f32 %v868, 1.0
    %v870 = vrcp.pop %v869
    %v871 = vmul.f32 1.0, %v870
    %v872 = vtanh.pop %v865
    %v874 = vrot.slane %v808, 7
    %v876 = vmul.f32 %v871, %v874
    %878 = vrot.lane.b32.xlu0 %v872, 116
    %v879 = vpop.permute.xlu0 %878
    %v881 = vmul.f32 %v871, %v879
    %883 = vrot.lane.b32.xlu0 %v881, 6
    %v884 = vpop.permute.xlu0 %883
    %v886 = vadd.f32 %v876, %v884
    %v887 = vtanh.pop %v886
    %889 = vrot.lane.b32.xlu0 %v887, 12
    %v890 = vpop.permute.xlu0 %889
    %v892 = vmul.f32 %v871, %v890
    %894 = vset.pattern.permute.xlu0 18
    %895 = vperm.xlu0 %894, %v892
    %v896 = vpop.permute.xlu0 %895
    %v898 = vrot.slane %v20, 7
    %v900 = vmul.f32 %v896, %v898
    %901 = vset.pattern.permute.xlu0 19
    %902 = vperm.xlu0 %901, %v892
    %v903 = vpop.permute.xlu0 %902
    %v905 = vmul.f32 %v903, %v20
    %v906 = vadd.f32 %v900, %v905
    %907 = vset.pattern.permute.xlu0 20
    %908 = vperm.xlu0 %907, %v892
    %v909 = vpop.permute.xlu0 %908
    %v911 = vmul.f32 %v909, %v826
    %v912 = vadd.f32 %v906, %v911
    %913 = vset.pattern.permute.xlu0 21
    %914 = vperm.xlu0 %913, %v892
    %v915 = vpop.permute.xlu0 %914
    %v917 = vmul.f32 %v915, %v834
    %v918 = vadd.f32 %v912, %v917
    %919 = vset.pattern.permute.xlu0 22
    %920 = vperm.xlu0 %919, %v892
    %v921 = vpop.permute.xlu0 %920
    %v923 = vmul.f32 %v921, %v842
    %v924 = vadd.f32 %v918, %v923
    %925 = vset.pattern.permute.xlu0 23
    %926 = vperm.xlu0 %925, %v892
    %v927 = vpop.permute.xlu0 %926
    %v929 = vmul.f32 %v927, %v850
    %v930 = vadd.f32 %v924, %v929
    %v932 = vrot.slane %v930, 7
    %v934 = vadd.f32 %v772, %v932
    %v935 = vxor.u32 %v934, 2147483648
    %v936 = vmul.f32 %v935, 1.442695
    %v937 = vpow.pop %v936
    %v938 = vadd.f32 %v937, 1.0
    %v939 = vrcp.pop %v938
    %v940 = vmul.f32 1.0, %v939
    %v941 = vtanh.pop %v934
    %v943 = vrot.slane %v886, 7
    %v945 = vmul.f32 %v940, %v943
    %947 = vrot.lane.b32.xlu0 %v941, 116
    %v948 = vpop.permute.xlu0 %947
    %v950 = vmul.f32 %v940, %v948
    %952 = vrot.lane.b32.xlu0 %v950, 6
    %v953 = vpop.permute.xlu0 %952
    %v955 = vadd.f32 %v945, %v953
    %v956 = vtanh.pop %v955
    %958 = vrot.lane.b32.xlu0 %v956, 12
    %v959 = vpop.permute.xlu0 %958
    %v961 = vmul.f32 %v940, %v959
    %963 = vset.pattern.permute.xlu0 18
    %964 = vperm.xlu0 %963, %v961
    %v965 = vpop.permute.xlu0 %964
    %v967 = vrot.slane %v20, 6
    %v969 = vmul.f32 %v965, %v967
    %970 = vset.pattern.permute.xlu0 19
    %971 = vperm.xlu0 %970, %v961
    %v972 = vpop.permute.xlu0 %971
    %v974 = vmul.f32 %v972, %v898
    %v975 = vadd.f32 %v969, %v974
    %976 = vset.pattern.permute.xlu0 20
    %977 = vperm.xlu0 %976, %v961
    %v978 = vpop.permute.xlu0 %977
    %v980 = vmul.f32 %v978, %v20
    %v981 = vadd.f32 %v975, %v980
    %982 = vset.pattern.permute.xlu0 21
    %983 = vperm.xlu0 %982, %v961
    %v984 = vpop.permute.xlu0 %983
    %v986 = vmul.f32 %v984, %v826
    %v987 = vadd.f32 %v981, %v986
    %988 = vset.pattern.permute.xlu0 22
    %989 = vperm.xlu0 %988, %v961
    %v990 = vpop.permute.xlu0 %989
    %v992 = vmul.f32 %v990, %v834
    %v993 = vadd.f32 %v987, %v992
    %994 = vset.pattern.permute.xlu0 23
    %995 = vperm.xlu0 %994, %v961
    %v996 = vpop.permute.xlu0 %995
    %v998 = vmul.f32 %v996, %v842
    %v999 = vadd.f32 %v993, %v998
    %v1001 = vrot.slane %v999, 7
    %v1003 = vadd.f32 %v772, %v1001
    %v1004 = vxor.u32 %v1003, 2147483648
    %v1005 = vmul.f32 %v1004, 1.442695
    %v1006 = vpow.pop %v1005
    %v1007 = vadd.f32 %v1006, 1.0
    %v1008 = vrcp.pop %v1007
    %v1009 = vmul.f32 1.0, %v1008
    %v1010 = vtanh.pop %v1003
    %v1012 = vrot.slane %v955, 7
    %v1014 = vmul.f32 %v1009, %v1012
    %1016 = vrot.lane.b32.xlu0 %v1010, 116
    %v1017 = vpop.permute.xlu0 %1016
    %v1019 = vmul.f32 %v1009, %v1017
    %1021 = vrot.lane.b32.xlu0 %v1019, 6
    %v1022 = vpop.permute.xlu0 %1021
    %v1024 = vadd.f32 %v1014, %v1022
    %v1025 = vtanh.pop %v1024
    %1027 = vrot.lane.b32.xlu0 %v1025, 12
    %v1028 = vpop.permute.xlu0 %1027
    %v1030 = vmul.f32 %v1009, %v1028
    %vm1031 = vcmask 1040384
    %v1032 = vsel %vm1031, %v814, %v892
    %vm1033 = vcmask 1041408
    %v1034 = vsel %vm1033, %v1032, %v961
    %vm1035 = vcmask 1042432
    %v1036 = vsel %vm1035, %v1034, %v1030
    %1038 = vset.pattern.permute.xlu0 18
    %1039 = vperm.xlu0 %1038, %v1036
    %v1040 = vpop.permute.xlu0 %1039
    %v1042 = vlaneseq
    %v1043 = vshrl.u32 %v1042, 7
    %v1044 = vsub.s32 7, %v1043
    %v1045 = vrot.slane %v20, %v1044
    %v1046 = vmul.f32 %v1040, %v1045
    %1047 = vset.pattern.permute.xlu0 19
    %1048 = vperm.xlu0 %1047, %v1036
    %v1049 = vpop.permute.xlu0 %1048
    %v1051 = vlaneseq
    %v1052 = vshrl.u32 %v1051, 7
    %v1053 = vsub.s32 0, %v1052
    %v1054 = vrot.slane %v21, %v1053
    %v1055 = vmul.f32 %v1049, %v1054
    %v1056 = vadd.f32 %v1046, %v1055
    %1057 = vset.pattern.permute.xlu0 20
    %1058 = vperm.xlu0 %1057, %v1036
    %v1059 = vpop.permute.xlu0 %1058
    %v1061 = vlaneseq
    %v1062 = vshrl.u32 %v1061, 7
    %v1063 = vsub.s32 1, %v1062
    %v1064 = vrot.slane %v21, %v1063
    %v1065 = vmul.f32 %v1059, %v1064
    %v1066 = vadd.f32 %v1056, %v1065
    %1067 = vset.pattern.permute.xlu0 21
    %1068 = vperm.xlu0 %1067, %v1036
    %v1069 = vpop.permute.xlu0 %1068
    %v1071 = vlaneseq
    %v1072 = vshrl.u32 %v1071, 7
    %v1073 = vsub.s32 2, %v1072
    %v1074 = vrot.slane %v21, %v1073
    %v1075 = vmul.f32 %v1069, %v1074
    %v1076 = vadd.f32 %v1066, %v1075
    %1077 = vset.pattern.permute.xlu0 22
    %1078 = vperm.xlu0 %1077, %v1036
    %v1079 = vpop.permute.xlu0 %1078
    %v1081 = vlaneseq
    %v1082 = vshrl.u32 %v1081, 7
    %v1083 = vsub.s32 3, %v1082
    %v1084 = vrot.slane %v21, %v1083
    %v1085 = vmul.f32 %v1079, %v1084
    %v1086 = vadd.f32 %v1076, %v1085
    %1087 = vset.pattern.permute.xlu0 23
    %1088 = vperm.xlu0 %1087, %v1036
    %v1089 = vpop.permute.xlu0 %1088
    %v1091 = vlaneseq
    %v1092 = vshrl.u32 %v1091, 7
    %v1093 = vsub.s32 4, %v1092
    %v1094 = vrot.slane %v21, %v1093
    %v1095 = vmul.f32 %v1089, %v1094
    %v1096 = vadd.f32 %v1086, %v1095
    %v1097 = vlaneseq
    %v1098 = vshrl.u32 %v1097, 7
    %v1099 = vsub.s32 5, %v1098
    %v1100 = vrot.slane %v21, %v1099
    %v1101 = vadd.f32 %v1096, %v1100
    %vm1102 = vcmask 19456
    %v1103 = vsel %vm1102, %v1101, -inf
    %1104 = vmax.xlane.f32.xlu0 %v1103
    %v1105 = vpop.xlane.xlu0 %1104
    %v1106 = vsub.f32 %v1101, %v1105
    %v1107 = vmul.f32 %v1106, 1.442695
    %v1108 = vpow.pop %v1107
    %v1109 = vsel %vm1102, %v1108, 0.0
    %1110 = vadd.xlane.f32.xlu0 %v1109
    %v1111 = vpop.xlane.xlu0 %1110
    %v1112 = vlog2.pop %v1111
    %v1113 = vmul.f32 %v1112, 0.6931472
    %v1114 = vadd.f32 %v1105, %v1113
    %v1115 = vsub.f32 %v1101, %v1114
    %1116 = vst.msk [vmem:[#allocation2] sm:$0xf] %vm1102, %v1115
    // Predicated region
    $region18: #{lstm_tagger_forward.1} parent=1 // pred_check
      _
    $region19: #{lstm_tagger_forward.1} parent=1 // pred_check_branch
      %1118 = sbr.rel (0) target = $region21
    $region20: #{lstm_tagger_forward.1} parent=1 // pred_region
      %s1120 = ssub.s32 64, 64
      %1121 = vsyncadd [#allocation3], %s1120
      %s1123 = sshll.u32 [#allocation2], 4
      %s1124 = int_to_ptr.vmem [resolvable:$true] %s1123
      %1126 = dma.vmem_to_hbm [thread:$0]  %s1124, 64, %s4, [#allocation3]
    $region21: #{lstm_tagger_forward.1} parent=1 // pred_fallthru
      _
    // Predicated region
    $region22: #{lstm_tagger_forward.1} parent=1 // pred_check
      _
    $region23: #{lstm_tagger_forward.1} parent=1 // pred_check_branch
      %1128 = sbr.rel (0) target = $region25
    $region24: #{lstm_tagger_forward.1} parent=1 // pred_region
      %1129 = dma.done [#allocation3], 64
    $region25: #{lstm_tagger_forward.1} parent=1 // pred_fallthru
      _
    %1130 = vsyncpa [#allocation3], 1

</llo_original>
